<compile_context>
chip_gen: v7x
topology: tpu7x:2x2x1
jax: 0.10.0
libtpu: 0.0.40
codegen_flags: <defaults>
</compile_context>

<pallas_src>
import functools
import math

import jax
import jax.numpy as jnp
from jax import lax
from jax.experimental import pallas as pl
from jax.experimental.pallas import tpu as pltpu

# Contract dim 1 of both operands -> a @ b.T for (out, in) weights, no transpose.
_DN = (((1,), (1,)), ((), ()))


# ---------------------------------------------------------------------------
# Kernel 1: K/V projection, hoisted out of the attention grid.
# ---------------------------------------------------------------------------
def _kv_proj_kernel(y_ref, wk_ref, bk_ref, wv_ref, bv_ref, k_ref, v_ref, *, n_heads):
    # y_ref: (TKV, d_cross) bf16 (batch squeezed).
    # wk_ref/wv_ref: (H, dh, d_cross) bf16; bk_ref/bv_ref: (H, 1, dh) f32.
    # k_ref/v_ref: (H, TKV, dh) bf16 (head-major so downstream head access is a
    # leading-axis index).  Per-head N=dh matmuls are narrower than one wide
    # projection, but this kernel runs once per KV position (not per q tile).
    y = y_ref[...]
    for h in range(n_heads):
        kh = lax.dot_general(y, wk_ref[h], _DN,
                             preferred_element_type=jnp.float32) + bk_ref[h]
        vh = lax.dot_general(y, wv_ref[h], _DN,
                             preferred_element_type=jnp.float32) + bv_ref[h]
        k_ref[h] = kh.astype(k_ref.dtype)
        v_ref[h] = vh.astype(v_ref.dtype)


# ---------------------------------------------------------------------------
# Kernel 2: fused Q-projection + flash attention + output projection.
# ---------------------------------------------------------------------------
def _attn_kernel(x_ref, k_ref, v_ref, wq_ref, bq_ref, wo_ref, bo_ref, o_ref,
                 q_scr, m_scr, l_scr, acc_scr, cat_scr,
                 *, n_heads, d_heads, kv_len, kv_block, scale, approx_recip):
    ki = pl.program_id(2)
    n_kv = pl.num_programs(2)

    # --- once per (batch, q-tile): project Q (scale + bias folded in), init stats.
    @pl.when(ki == 0)
    def _():
        x = x_ref[...]
        for h in range(n_heads):
            qh = lax.dot_general(x, wq_ref[h], _DN,
                                 preferred_element_type=jnp.float32)
            q_scr[h] = ((qh + bq_ref[h]) * scale).astype(jnp.bfloat16)
        m_scr[...] = jnp.full(m_scr.shape, -jnp.inf, jnp.float32)
        l_scr[...] = jnp.zeros(l_scr.shape, jnp.float32)
        acc_scr[...] = jnp.zeros(acc_scr.shape, jnp.float32)

    # --- per KV tile: online softmax per head (f32 softmax math, bf16 matmuls).
    needs_mask = (kv_len % kv_block) != 0
    if needs_mask:
        col_valid = (ki * kv_block
                     + lax.broadcasted_iota(jnp.int32, (1, kv_block), 1)) < kv_len
        row_valid = (ki * kv_block
                     + lax.broadcasted_iota(jnp.int32, (kv_block, 1), 0)) < kv_len

    for h in range(n_heads):
        qh = q_scr[h]                                   # (TQ,  dh) bf16
        kh = k_ref[h]                                   # (TKV, dh) bf16
        vh = v_ref[h]                                   # (TKV, dh) bf16
        s = lax.dot_general(qh, kh, _DN,
                            preferred_element_type=jnp.float32)   # (TQ, TKV)
        if needs_mask:
            s = jnp.where(col_valid, s, jnp.float32(-1e30))
            vh = jnp.where(row_valid, vh, jnp.zeros_like(vh))
        m_prev = m_scr[h]
        m_new = jnp.maximum(m_prev, jnp.max(s, axis=-1, keepdims=True))
        alpha = jnp.exp(m_prev - m_new)
        p = jnp.exp(s - m_new)                          # unnormalized; scaled at the end
        l_scr[h] = alpha * l_scr[h] + jnp.sum(p, axis=-1, keepdims=True)
        acc_scr[h] = alpha * acc_scr[h] + jnp.dot(
            p.astype(jnp.bfloat16), vh, preferred_element_type=jnp.float32)
        m_scr[h] = m_new

    # --- last KV tile: normalize, concat heads (lane offsets), one wide out-proj.
    @pl.when(ki == n_kv - 1)
    def _():
        for h in range(n_heads):
            l = l_scr[h]
            inv = pl.reciprocal(l, approx=True) if approx_recip else 1.0 / l
            cat_scr[:, h * d_heads:(h + 1) * d_heads] = (
                acc_scr[h] * inv).astype(jnp.bfloat16)
        o = lax.dot_general(cat_scr[...], wo_ref[...], _DN,
                            preferred_element_type=jnp.float32) + bo_ref[...]
        o_ref[...] = o.astype(o_ref.dtype)


# ---------------------------------------------------------------------------
# Wrapper
# ---------------------------------------------------------------------------
def _round_up(x, m):
    return (x + m - 1) // m * m


def cross_attention(x, y, params, *, n_heads, q_block=256, kv_block=512,
                    approx_reciprocal=True, single_buffer_weights=True):
    """x: (B, Lq, d_embd) f32; y: (B, Lkv, d_cross) f32."""
    B, Lq, d_embd = x.shape
    _, Lkv, d_cross = y.shape
    dh = d_embd // n_heads
    assert n_heads * dh == d_embd
    out_dtype = x.dtype

    wq, bq, wk, bk, wv, bv, wo, bo = params

    # Lane-dense output: pad the out-proj out-dim to a multiple of 128 lanes.
    d_out_pad = _round_up(d_embd, 128)
    pad = d_out_pad - d_embd
    wo_p = jnp.pad(wo, ((0, pad), (0, 0))) if pad else wo
    bo_p = jnp.pad(bo, ((0, pad),)) if pad else bo

    # Head-split in-projection weights -> per-head kernel access is a cheap
    # leading-axis index (no lane slicing of Q/K/V).
    wq_h = wq.reshape(n_heads, dh, d_embd).astype(jnp.bfloat16)
    wk_h = wk.reshape(n_heads, dh, d_cross).astype(jnp.bfloat16)
    wv_h = wv.reshape(n_heads, dh, d_cross).astype(jnp.bfloat16)
    bq_h = bq.reshape(n_heads, 1, dh).astype(jnp.float32)
    bk_h = bk.reshape(n_heads, 1, dh).astype(jnp.float32)
    bv_h = bv.reshape(n_heads, 1, dh).astype(jnp.float32)
    wo_b = wo_p.astype(jnp.bfloat16)
    bo_2 = bo_p.reshape(1, -1).astype(jnp.float32)

    xb = x.astype(jnp.bfloat16)
    yb = y.astype(jnp.bfloat16)

    # Tile sizes: full extent if it fits, else the (8-aligned) block size.
    tq = Lq if Lq <= q_block else q_block
    tkv = Lkv if Lkv <= kv_block else kv_block
    n_q = pl.cdiv(Lq, tq)
    n_kv = pl.cdiv(Lkv, tkv)

    # Generation-aware VMEM budget: leave ~24 MiB headroom for pipeline
    # buffers / compiler scratch (~40 MiB on v7x, ~104 MiB on 128 MiB parts).
    try:
        vmem_cap = pltpu.get_tpu_info().vmem_capacity_bytes
    except Exception:
        vmem_cap = 64 * 1024 * 1024
    vmem_limit = max(32 * 1024 * 1024, int(vmem_cap) - 24 * 1024 * 1024)

    scale = 1.0 / math.sqrt(dh)

    def run(single_buffer):
        # Grid-invariant weight/bias blocks: single-buffer to halve their VMEM.
        const = {"pipeline_mode": pl.Buffered(1)} if single_buffer else {}

        # ----- kernel 1: K/V projection (hoisted; runs once per KV position) -----
        kv_flops = 4 * B * Lkv * d_cross * d_embd
        kv_bytes = ((yb.size + wk_h.size + wv_h.size) * 2
                    + (bk_h.size + bv_h.size) * 4
                    + 2 * B * n_heads * Lkv * dh * 2)
        k_hm, v_hm = pl.pallas_call(
            functools.partial(_kv_proj_kernel, n_heads=n_heads),
            out_shape=(jax.ShapeDtypeStruct((B, n_heads, Lkv, dh), jnp.bfloat16),
                       jax.ShapeDtypeStruct((B, n_heads, Lkv, dh), jnp.bfloat16)),
            grid_spec=pltpu.PrefetchScalarGridSpec(
                num_scalar_prefetch=0,
                grid=(B, n_kv),
                in_specs=[
                    pl.BlockSpec((pl.Squeezed(), tkv, d_cross),
                                 lambda b, ki: (b, ki, 0)),
                    pl.BlockSpec(wk_h.shape, lambda b, ki: (0, 0, 0), **const),
                    pl.BlockSpec(bk_h.shape, lambda b, ki: (0, 0, 0), **const),
                    pl.BlockSpec(wv_h.shape, lambda b, ki: (0, 0, 0), **const),
                    pl.BlockSpec(bv_h.shape, lambda b, ki: (0, 0, 0), **const),
                ],
                out_specs=(
                    pl.BlockSpec((pl.Squeezed(), n_heads, tkv, dh),
                                 lambda b, ki: (b, 0, ki, 0)),
                    pl.BlockSpec((pl.Squeezed(), n_heads, tkv, dh),
                                 lambda b, ki: (b, 0, ki, 0)),
                ),
            ),
            compiler_params=pltpu.CompilerParams(
                dimension_semantics=("parallel", "parallel"),
                vmem_limit_bytes=vmem_limit,
            ),
            cost_estimate=pl.CostEstimate(
                flops=kv_flops, transcendentals=0, bytes_accessed=kv_bytes),
        )(yb, wk_h, bk_h, wv_h, bv_h)

        # ----- kernel 2: flash attention + fused Q proj + output proj -----
        attn_flops = (2 * B * Lq * d_embd * d_embd          # Q projection
                      + 4 * B * n_heads * Lq * Lkv * dh      # scores + PV
                      + 2 * B * Lq * d_embd * d_out_pad)     # output projection
        attn_trans = B * n_heads * Lq * Lkv
        attn_bytes = ((xb.size + k_hm.size + v_hm.size + wq_h.size + wo_b.size) * 2
                      + (bq_h.size + bo_2.size) * 4
                      + B * Lq * d_out_pad * x.dtype.itemsize)

        kernel = functools.partial(
            _attn_kernel, n_heads=n_heads, d_heads=dh, kv_len=Lkv,
            kv_block=tkv, scale=scale, approx_recip=approx_reciprocal)

        out = pl.pallas_call(
            kernel,
            out_shape=jax.ShapeDtypeStruct((B, Lq, d_out_pad), out_dtype),
            grid_spec=pltpu.PrefetchScalarGridSpec(
                num_scalar_prefetch=0,
                grid=(B, n_q, n_kv),
                in_specs=[
                    pl.BlockSpec((pl.Squeezed(), tq, d_embd),
                                 lambda b, qi, ki: (b, qi, 0)),
                    pl.BlockSpec((pl.Squeezed(), n_heads, tkv, dh),
                                 lambda b, qi, ki: (b, 0, ki, 0)),
                    pl.BlockSpec((pl.Squeezed(), n_heads, tkv, dh),
                                 lambda b, qi, ki: (b, 0, ki, 0)),
                    pl.BlockSpec(wq_h.shape, lambda b, qi, ki: (0, 0, 0), **const),
                    pl.BlockSpec(bq_h.shape, lambda b, qi, ki: (0, 0, 0), **const),
                    pl.BlockSpec(wo_b.shape, lambda b, qi, ki: (0, 0), **const),
                    pl.BlockSpec(bo_2.shape, lambda b, qi, ki: (0, 0), **const),
                ],
                out_specs=pl.BlockSpec((pl.Squeezed(), tq, d_out_pad),
                                       lambda b, qi, ki: (b, qi, 0)),
                scratch_shapes=[
                    pltpu.VMEM((n_heads, tq, dh), jnp.bfloat16),   # scaled Q
                    pltpu.VMEM((n_heads, tq, 1), jnp.float32),     # running max m
                    pltpu.VMEM((n_heads, tq, 1), jnp.float32),     # running sum l
                    pltpu.VMEM((n_heads, tq, dh), jnp.float32),    # running acc
                    pltpu.VMEM((tq, d_embd), jnp.bfloat16),        # concat heads
                ],
            ),
            compiler_params=pltpu.CompilerParams(
                dimension_semantics=("parallel", "parallel", "arbitrary"),
                vmem_limit_bytes=vmem_limit,
            ),
            cost_estimate=pl.CostEstimate(
                flops=attn_flops, transcendentals=attn_trans,
                bytes_accessed=attn_bytes),
        )(xb, k_hm, v_hm, wq_h, bq_h, wo_b, bo_2)
        return out

    if single_buffer_weights:
        try:
            out = run(True)
        except Exception:
            # pl.Buffered(1) not supported by this JAX build -> default buffering.
            out = run(False)
    else:
        out = run(False)

    return out[..., :d_embd] if pad else out


# ---------------------------------------------------------------------------
# Pure-JAX reference (mirrors the PyTorch forward) + demo
# ---------------------------------------------------------------------------
def _reference(x, y, params, *, n_heads):
    wq, bq, wk, bk, wv, bv, wo, bo = params
    B, Lq, D = x.shape
    dh = D // n_heads
    q = x @ wq.T + bq
    k = y @ wk.T + bk
    v = y @ wv.T + bv
    q = q.reshape(B, -1, n_heads, dh).transpose(0, 2, 1, 3)
    k = k.reshape(B, -1, n_heads, dh).transpose(0, 2, 1, 3)
    v = v.reshape(B, -1, n_heads, dh).transpose(0, 2, 1, 3)
    w = jnp.einsum('bhqd,bhkd->bhqk', q, k) / math.sqrt(dh)
    w = jax.nn.softmax(w, axis=-1)
    o = jnp.einsum('bhqk,bhkd->bhqd', w, v)
    o = o.transpose(0, 2, 1, 3).reshape(B, Lq, D)
    return o @ wo.T + bo


def _init_linear(key, out_dim, in_dim):
    # PyTorch-style init: U(-1/sqrt(fan_in), 1/sqrt(fan_in)).
    kw, kb = jax.random.split(key)
    bound = 1.0 / math.sqrt(in_dim)
    w = jax.random.uniform(kw, (out_dim, in_dim), jnp.float32, -bound, bound)
    b = jax.random.uniform(kb, (out_dim,), jnp.float32, -bound, bound)
    return w, b


if __name__ == "__main__":
    B, Lq, Lkv = 2, 16, 8
    n_heads, d_embd, d_cross = 4, 32, 16

    key = jax.random.PRNGKey(0)
    kx, ky, kq, kk, kv, ko = jax.random.split(key, 6)

    x = jax.random.normal(kx, (B, Lq, d_embd), jnp.float32)
    y = jax.random.normal(ky, (B, Lkv, d_cross), jnp.float32)

    wq, bq = _init_linear(kq, d_embd, d_embd)
    wk, bk = _init_linear(kk, d_embd, d_cross)
    wv, bv = _init_linear(kv, d_embd, d_cross)
    wo, bo = _init_linear(ko, d_embd, d_embd)
    params = (wq, bq, wk, bk, wv, bv, wo, bo)

    out = cross_attention(x, y, params, n_heads=n_heads)
    out = jax.block_until_ready(out)

    ref = _reference(x, y, params, n_heads=n_heads)
    assert out.shape == (B, Lq, d_embd)
    # bf16 MXU inputs (f32 accumulation) + approx reciprocal -> bf16 tolerance.
    err = float(jnp.max(jnp.abs(out - ref)))
    assert jnp.allclose(out, ref, atol=5e-2, rtol=5e-2), \
        f"mismatch vs reference, max err={err}"

    print("KERNEL_OK")
</pallas_src>

<mosaic_0001>
module attributes {stable_mosaic.version = 11 : i64} {
  func.func @_kv_proj_kernel(%arg0: i32, %arg1: i32, %arg2: memref<1x8x16xbf16, #tpu.memory_space<vmem>>, %arg3: memref<4x8x16xbf16, #tpu.memory_space<vmem>>, %arg4: memref<4x1x8xf32, #tpu.memory_space<vmem>>, %arg5: memref<4x8x16xbf16, #tpu.memory_space<vmem>>, %arg6: memref<4x1x8xf32, #tpu.memory_space<vmem>>, %arg7: memref<1x4x8x8xbf16, #tpu.memory_space<vmem>>, %arg8: memref<1x4x8x8xbf16, #tpu.memory_space<vmem>>) attributes {dimension_semantics = [#tpu.dimension_semantics<parallel>, #tpu.dimension_semantics<parallel>], iteration_bounds = array<i64: 2, 1>, scalar_prefetch = 0 : i64, scratch_operands = 0 : i64, tpu.core_type = #tpu.core_type<tc>, window_params = [{transform_indices = @transform_0, window_bounds = array<i64: 1, 8, 16>}, {pipeline_mode = #tpu.pipeline_mode<synchronous>, transform_indices = @transform_1, window_bounds = array<i64: 4, 8, 16>}, {pipeline_mode = #tpu.pipeline_mode<synchronous>, transform_indices = @transform_2, window_bounds = array<i64: 4, 1, 8>}, {pipeline_mode = #tpu.pipeline_mode<synchronous>, transform_indices = @transform_3, window_bounds = array<i64: 4, 8, 16>}, {pipeline_mode = #tpu.pipeline_mode<synchronous>, transform_indices = @transform_4, window_bounds = array<i64: 4, 1, 8>}, {transform_indices = @transform_5, window_bounds = array<i64: 1, 4, 8, 8>}, {transform_indices = @transform_6, window_bounds = array<i64: 1, 4, 8, 8>}]} {
    %c0 = arith.constant 0 : index
    %c0_0 = arith.constant 0 : index
    %c0_1 = arith.constant 0 : index
    %0 = vector.load %arg2[%c0, %c0_0, %c0_1] : memref<1x8x16xbf16, #tpu.memory_space<vmem>>, vector<1x8x16xbf16>
    %1 = vector.shape_cast %0 : vector<1x8x16xbf16> to vector<8x16xbf16>
    %c0_2 = arith.constant 0 : index
    %c0_3 = arith.constant 0 : index
    %c0_4 = arith.constant 0 : index
    %2 = vector.load %arg3[%c0_2, %c0_3, %c0_4] : memref<4x8x16xbf16, #tpu.memory_space<vmem>>, vector<1x8x16xbf16>
    %3 = vector.shape_cast %2 : vector<1x8x16xbf16> to vector<8x16xbf16>
    %cst = arith.constant dense<0.000000e+00> : vector<8x8xf32>
    %4 = tpu.matmul %1, %3, %cst {dimension_numbers = #tpu.dot_dimension_numbers<[1], [1], [0], [0], [0, 0, 1, 0], [], []>} : vector<8x16xbf16>, vector<8x16xbf16>, vector<8x8xf32> -> vector<8x8xf32>
    %c0_5 = arith.constant 0 : index
    %c0_6 = arith.constant 0 : index
    %c0_7 = arith.constant 0 : index
    %5 = vector.load %arg4[%c0_5, %c0_6, %c0_7] : memref<4x1x8xf32, #tpu.memory_space<vmem>>, vector<1x1x8xf32>
    %6 = vector.shape_cast %5 : vector<1x1x8xf32> to vector<1x8xf32>
    %7 = vector.broadcast %6 : vector<1x8xf32> to vector<8x8xf32>
    %8 = arith.addf %4, %7 : vector<8x8xf32>
    %c0_8 = arith.constant 0 : index
    %c0_9 = arith.constant 0 : index
    %c0_10 = arith.constant 0 : index
    %9 = vector.load %arg5[%c0_8, %c0_9, %c0_10] : memref<4x8x16xbf16, #tpu.memory_space<vmem>>, vector<1x8x16xbf16>
    %10 = vector.shape_cast %9 : vector<1x8x16xbf16> to vector<8x16xbf16>
    %cst_11 = arith.constant dense<0.000000e+00> : vector<8x8xf32>
    %11 = tpu.matmul %1, %10, %cst_11 {dimension_numbers = #tpu.dot_dimension_numbers<[1], [1], [0], [0], [0, 0, 1, 0], [], []>} : vector<8x16xbf16>, vector<8x16xbf16>, vector<8x8xf32> -> vector<8x8xf32>
    %c0_12 = arith.constant 0 : index
    %c0_13 = arith.constant 0 : index
    %c0_14 = arith.constant 0 : index
    %12 = vector.load %arg6[%c0_12, %c0_13, %c0_14] : memref<4x1x8xf32, #tpu.memory_space<vmem>>, vector<1x1x8xf32>
    %13 = vector.shape_cast %12 : vector<1x1x8xf32> to vector<1x8xf32>
    %14 = vector.broadcast %13 : vector<1x8xf32> to vector<8x8xf32>
    %15 = arith.addf %11, %14 : vector<8x8xf32>
    %16 = arith.truncf %8 : vector<8x8xf32> to vector<8x8xbf16>
    %c0_15 = arith.constant 0 : index
    %c0_16 = arith.constant 0 : index
    %c0_17 = arith.constant 0 : index
    %c0_18 = arith.constant 0 : index
    %17 = vector.load %arg7[%c0_15, %c0_16, %c0_17, %c0_18] : memref<1x4x8x8xbf16, #tpu.memory_space<vmem>>, vector<1x1x8x8xbf16>
    %18 = vector.shape_cast %17 : vector<1x1x8x8xbf16> to vector<8x8xbf16>
    %19 = vector.shape_cast %16 : vector<8x8xbf16> to vector<1x1x8x8xbf16>
    tpu.vector_store %arg7[%c0_15, %c0_16, %c0_17, %c0_18], %19 {strides = array<i32>} : memref<1x4x8x8xbf16, #tpu.memory_space<vmem>>, vector<1x1x8x8xbf16>,
    %20 = arith.truncf %15 : vector<8x8xf32> to vector<8x8xbf16>
    %c0_19 = arith.constant 0 : index
    %c0_20 = arith.constant 0 : index
    %c0_21 = arith.constant 0 : index
    %c0_22 = arith.constant 0 : index
    %21 = vector.load %arg8[%c0_19, %c0_20, %c0_21, %c0_22] : memref<1x4x8x8xbf16, #tpu.memory_space<vmem>>, vector<1x1x8x8xbf16>
    %22 = vector.shape_cast %21 : vector<1x1x8x8xbf16> to vector<8x8xbf16>
    %23 = vector.shape_cast %20 : vector<8x8xbf16> to vector<1x1x8x8xbf16>
    tpu.vector_store %arg8[%c0_19, %c0_20, %c0_21, %c0_22], %23 {strides = array<i32>} : memref<1x4x8x8xbf16, #tpu.memory_space<vmem>>, vector<1x1x8x8xbf16>,
    %c1 = arith.constant 1 : index
    %c0_23 = arith.constant 0 : index
    %c0_24 = arith.constant 0 : index
    %24 = vector.load %arg3[%c1, %c0_23, %c0_24] : memref<4x8x16xbf16, #tpu.memory_space<vmem>>, vector<1x8x16xbf16>
    %25 = vector.shape_cast %24 : vector<1x8x16xbf16> to vector<8x16xbf16>
    %cst_25 = arith.constant dense<0.000000e+00> : vector<8x8xf32>
    %26 = tpu.matmul %1, %25, %cst_25 {dimension_numbers = #tpu.dot_dimension_numbers<[1], [1], [0], [0], [0, 0, 1, 0], [], []>} : vector<8x16xbf16>, vector<8x16xbf16>, vector<8x8xf32> -> vector<8x8xf32>
    %c1_26 = arith.constant 1 : index
    %c0_27 = arith.constant 0 : index
    %c0_28 = arith.constant 0 : index
    %27 = vector.load %arg4[%c1_26, %c0_27, %c0_28] : memref<4x1x8xf32, #tpu.memory_space<vmem>>, vector<1x1x8xf32>
    %28 = vector.shape_cast %27 : vector<1x1x8xf32> to vector<1x8xf32>
    %29 = vector.broadcast %28 : vector<1x8xf32> to vector<8x8xf32>
    %30 = arith.addf %26, %29 : vector<8x8xf32>
    %c1_29 = arith.constant 1 : index
    %c0_30 = arith.constant 0 : index
    %c0_31 = arith.constant 0 : index
    %31 = vector.load %arg5[%c1_29, %c0_30, %c0_31] : memref<4x8x16xbf16, #tpu.memory_space<vmem>>, vector<1x8x16xbf16>
    %32 = vector.shape_cast %31 : vector<1x8x16xbf16> to vector<8x16xbf16>
    %cst_32 = arith.constant dense<0.000000e+00> : vector<8x8xf32>
    %33 = tpu.matmul %1, %32, %cst_32 {dimension_numbers = #tpu.dot_dimension_numbers<[1], [1], [0], [0], [0, 0, 1, 0], [], []>} : vector<8x16xbf16>, vector<8x16xbf16>, vector<8x8xf32> -> vector<8x8xf32>
    %c1_33 = arith.constant 1 : index
    %c0_34 = arith.constant 0 : index
    %c0_35 = arith.constant 0 : index
    %34 = vector.load %arg6[%c1_33, %c0_34, %c0_35] : memref<4x1x8xf32, #tpu.memory_space<vmem>>, vector<1x1x8xf32>
    %35 = vector.shape_cast %34 : vector<1x1x8xf32> to vector<1x8xf32>
    %36 = vector.broadcast %35 : vector<1x8xf32> to vector<8x8xf32>
    %37 = arith.addf %33, %36 : vector<8x8xf32>
    %38 = arith.truncf %30 : vector<8x8xf32> to vector<8x8xbf16>
    %c0_36 = arith.constant 0 : index
    %c1_37 = arith.constant 1 : index
    %c0_38 = arith.constant 0 : index
    %c0_39 = arith.constant 0 : index
    %39 = vector.load %arg7[%c0_36, %c1_37, %c0_38, %c0_39] : memref<1x4x8x8xbf16, #tpu.memory_space<vmem>>, vector<1x1x8x8xbf16>
    %40 = vector.shape_cast %39 : vector<1x1x8x8xbf16> to vector<8x8xbf16>
    %41 = vector.shape_cast %38 : vector<8x8xbf16> to vector<1x1x8x8xbf16>
    tpu.vector_store %arg7[%c0_36, %c1_37, %c0_38, %c0_39], %41 {strides = array<i32>} : memref<1x4x8x8xbf16, #tpu.memory_space<vmem>>, vector<1x1x8x8xbf16>,
    %42 = arith.truncf %37 : vector<8x8xf32> to vector<8x8xbf16>
    %c0_40 = arith.constant 0 : index
    %c1_41 = arith.constant 1 : index
    %c0_42 = arith.constant 0 : index
    %c0_43 = arith.constant 0 : index
    %43 = vector.load %arg8[%c0_40, %c1_41, %c0_42, %c0_43] : memref<1x4x8x8xbf16, #tpu.memory_space<vmem>>, vector<1x1x8x8xbf16>
    %44 = vector.shape_cast %43 : vector<1x1x8x8xbf16> to vector<8x8xbf16>
    %45 = vector.shape_cast %42 : vector<8x8xbf16> to vector<1x1x8x8xbf16>
    tpu.vector_store %arg8[%c0_40, %c1_41, %c0_42, %c0_43], %45 {strides = array<i32>} : memref<1x4x8x8xbf16, #tpu.memory_space<vmem>>, vector<1x1x8x8xbf16>,
    %c2 = arith.constant 2 : index
    %c0_44 = arith.constant 0 : index
    %c0_45 = arith.constant 0 : index
    %46 = vector.load %arg3[%c2, %c0_44, %c0_45] : memref<4x8x16xbf16, #tpu.memory_space<vmem>>, vector<1x8x16xbf16>
    %47 = vector.shape_cast %46 : vector<1x8x16xbf16> to vector<8x16xbf16>
    %cst_46 = arith.constant dense<0.000000e+00> : vector<8x8xf32>
    %48 = tpu.matmul %1, %47, %cst_46 {dimension_numbers = #tpu.dot_dimension_numbers<[1], [1], [0], [0], [0, 0, 1, 0], [], []>} : vector<8x16xbf16>, vector<8x16xbf16>, vector<8x8xf32> -> vector<8x8xf32>
    %c2_47 = arith.constant 2 : index
    %c0_48 = arith.constant 0 : index
    %c0_49 = arith.constant 0 : index
    %49 = vector.load %arg4[%c2_47, %c0_48, %c0_49] : memref<4x1x8xf32, #tpu.memory_space<vmem>>, vector<1x1x8xf32>
    %50 = vector.shape_cast %49 : vector<1x1x8xf32> to vector<1x8xf32>
    %51 = vector.broadcast %50 : vector<1x8xf32> to vector<8x8xf32>
    %52 = arith.addf %48, %51 : vector<8x8xf32>
    %c2_50 = arith.constant 2 : index
    %c0_51 = arith.constant 0 : index
    %c0_52 = arith.constant 0 : index
    %53 = vector.load %arg5[%c2_50, %c0_51, %c0_52] : memref<4x8x16xbf16, #tpu.memory_space<vmem>>, vector<1x8x16xbf16>
    %54 = vector.shape_cast %53 : vector<1x8x16xbf16> to vector<8x16xbf16>
    %cst_53 = arith.constant dense<0.000000e+00> : vector<8x8xf32>
    %55 = tpu.matmul %1, %54, %cst_53 {dimension_numbers = #tpu.dot_dimension_numbers<[1], [1], [0], [0], [0, 0, 1, 0], [], []>} : vector<8x16xbf16>, vector<8x16xbf16>, vector<8x8xf32> -> vector<8x8xf32>
    %c2_54 = arith.constant 2 : index
    %c0_55 = arith.constant 0 : index
    %c0_56 = arith.constant 0 : index
    %56 = vector.load %arg6[%c2_54, %c0_55, %c0_56] : memref<4x1x8xf32, #tpu.memory_space<vmem>>, vector<1x1x8xf32>
    %57 = vector.shape_cast %56 : vector<1x1x8xf32> to vector<1x8xf32>
    %58 = vector.broadcast %57 : vector<1x8xf32> to vector<8x8xf32>
    %59 = arith.addf %55, %58 : vector<8x8xf32>
    %60 = arith.truncf %52 : vector<8x8xf32> to vector<8x8xbf16>
    %c0_57 = arith.constant 0 : index
    %c2_58 = arith.constant 2 : index
    %c0_59 = arith.constant 0 : index
    %c0_60 = arith.constant 0 : index
    %61 = vector.load %arg7[%c0_57, %c2_58, %c0_59, %c0_60] : memref<1x4x8x8xbf16, #tpu.memory_space<vmem>>, vector<1x1x8x8xbf16>
    %62 = vector.shape_cast %61 : vector<1x1x8x8xbf16> to vector<8x8xbf16>
    %63 = vector.shape_cast %60 : vector<8x8xbf16> to vector<1x1x8x8xbf16>
    tpu.vector_store %arg7[%c0_57, %c2_58, %c0_59, %c0_60], %63 {strides = array<i32>} : memref<1x4x8x8xbf16, #tpu.memory_space<vmem>>, vector<1x1x8x8xbf16>,
    %64 = arith.truncf %59 : vector<8x8xf32> to vector<8x8xbf16>
    %c0_61 = arith.constant 0 : index
    %c2_62 = arith.constant 2 : index
    %c0_63 = arith.constant 0 : index
    %c0_64 = arith.constant 0 : index
    %65 = vector.load %arg8[%c0_61, %c2_62, %c0_63, %c0_64] : memref<1x4x8x8xbf16, #tpu.memory_space<vmem>>, vector<1x1x8x8xbf16>
    %66 = vector.shape_cast %65 : vector<1x1x8x8xbf16> to vector<8x8xbf16>
    %67 = vector.shape_cast %64 : vector<8x8xbf16> to vector<1x1x8x8xbf16>
    tpu.vector_store %arg8[%c0_61, %c2_62, %c0_63, %c0_64], %67 {strides = array<i32>} : memref<1x4x8x8xbf16, #tpu.memory_space<vmem>>, vector<1x1x8x8xbf16>,
    %c3 = arith.constant 3 : index
    %c0_65 = arith.constant 0 : index
    %c0_66 = arith.constant 0 : index
    %68 = vector.load %arg3[%c3, %c0_65, %c0_66] : memref<4x8x16xbf16, #tpu.memory_space<vmem>>, vector<1x8x16xbf16>
    %69 = vector.shape_cast %68 : vector<1x8x16xbf16> to vector<8x16xbf16>
    %cst_67 = arith.constant dense<0.000000e+00> : vector<8x8xf32>
    %70 = tpu.matmul %1, %69, %cst_67 {dimension_numbers = #tpu.dot_dimension_numbers<[1], [1], [0], [0], [0, 0, 1, 0], [], []>} : vector<8x16xbf16>, vector<8x16xbf16>, vector<8x8xf32> -> vector<8x8xf32>
    %c3_68 = arith.constant 3 : index
    %c0_69 = arith.constant 0 : index
    %c0_70 = arith.constant 0 : index
    %71 = vector.load %arg4[%c3_68, %c0_69, %c0_70] : memref<4x1x8xf32, #tpu.memory_space<vmem>>, vector<1x1x8xf32>
    %72 = vector.shape_cast %71 : vector<1x1x8xf32> to vector<1x8xf32>
    %73 = vector.broadcast %72 : vector<1x8xf32> to vector<8x8xf32>
    %74 = arith.addf %70, %73 : vector<8x8xf32>
    %c3_71 = arith.constant 3 : index
    %c0_72 = arith.constant 0 : index
    %c0_73 = arith.constant 0 : index
    %75 = vector.load %arg5[%c3_71, %c0_72, %c0_73] : memref<4x8x16xbf16, #tpu.memory_space<vmem>>, vector<1x8x16xbf16>
    %76 = vector.shape_cast %75 : vector<1x8x16xbf16> to vector<8x16xbf16>
    %cst_74 = arith.constant dense<0.000000e+00> : vector<8x8xf32>
    %77 = tpu.matmul %1, %76, %cst_74 {dimension_numbers = #tpu.dot_dimension_numbers<[1], [1], [0], [0], [0, 0, 1, 0], [], []>} : vector<8x16xbf16>, vector<8x16xbf16>, vector<8x8xf32> -> vector<8x8xf32>
    %c3_75 = arith.constant 3 : index
    %c0_76 = arith.constant 0 : index
    %c0_77 = arith.constant 0 : index
    %78 = vector.load %arg6[%c3_75, %c0_76, %c0_77] : memref<4x1x8xf32, #tpu.memory_space<vmem>>, vector<1x1x8xf32>
    %79 = vector.shape_cast %78 : vector<1x1x8xf32> to vector<1x8xf32>
    %80 = vector.broadcast %79 : vector<1x8xf32> to vector<8x8xf32>
    %81 = arith.addf %77, %80 : vector<8x8xf32>
    %82 = arith.truncf %74 : vector<8x8xf32> to vector<8x8xbf16>
    %c0_78 = arith.constant 0 : index
    %c3_79 = arith.constant 3 : index
    %c0_80 = arith.constant 0 : index
    %c0_81 = arith.constant 0 : index
    %83 = vector.load %arg7[%c0_78, %c3_79, %c0_80, %c0_81] : memref<1x4x8x8xbf16, #tpu.memory_space<vmem>>, vector<1x1x8x8xbf16>
    %84 = vector.shape_cast %83 : vector<1x1x8x8xbf16> to vector<8x8xbf16>
    %85 = vector.shape_cast %82 : vector<8x8xbf16> to vector<1x1x8x8xbf16>
    tpu.vector_store %arg7[%c0_78, %c3_79, %c0_80, %c0_81], %85 {strides = array<i32>} : memref<1x4x8x8xbf16, #tpu.memory_space<vmem>>, vector<1x1x8x8xbf16>,
    %86 = arith.truncf %81 : vector<8x8xf32> to vector<8x8xbf16>
    %c0_82 = arith.constant 0 : index
    %c3_83 = arith.constant 3 : index
    %c0_84 = arith.constant 0 : index
    %c0_85 = arith.constant 0 : index
    %87 = vector.load %arg8[%c0_82, %c3_83, %c0_84, %c0_85] : memref<1x4x8x8xbf16, #tpu.memory_space<vmem>>, vector<1x1x8x8xbf16>
    %88 = vector.shape_cast %87 : vector<1x1x8x8xbf16> to vector<8x8xbf16>
    %89 = vector.shape_cast %86 : vector<8x8xbf16> to vector<1x1x8x8xbf16>
    tpu.vector_store %arg8[%c0_82, %c3_83, %c0_84, %c0_85], %89 {strides = array<i32>} : memref<1x4x8x8xbf16, #tpu.memory_space<vmem>>, vector<1x1x8x8xbf16>,
    return
  }
  func.func @transform_0(%arg0: i32, %arg1: i32) -> (i32, i32, i32) {
    %c0_i32 = arith.constant 0 : i32
    %c0_i32_0 = arith.constant 0 : i32
    return %arg0, %arg1, %c0_i32 : i32, i32, i32
  }
  func.func @transform_1(%arg0: i32, %arg1: i32) -> (i32, i32, i32) {
    %c0_i32 = arith.constant 0 : i32
    %c0_i32_0 = arith.constant 0 : i32
    %c0_i32_1 = arith.constant 0 : i32
    %c0_i32_2 = arith.constant 0 : i32
    return %c0_i32, %c0_i32_0, %c0_i32_1 : i32, i32, i32
  }
  func.func @transform_2(%arg0: i32, %arg1: i32) -> (i32, i32, i32) {
    %c0_i32 = arith.constant 0 : i32
    %c0_i32_0 = arith.constant 0 : i32
    %c0_i32_1 = arith.constant 0 : i32
    %c0_i32_2 = arith.constant 0 : i32
    return %c0_i32, %c0_i32_0, %c0_i32_1 : i32, i32, i32
  }
  func.func @transform_3(%arg0: i32, %arg1: i32) -> (i32, i32, i32) {
    %c0_i32 = arith.constant 0 : i32
    %c0_i32_0 = arith.constant 0 : i32
    %c0_i32_1 = arith.constant 0 : i32
    %c0_i32_2 = arith.constant 0 : i32
    return %c0_i32, %c0_i32_0, %c0_i32_1 : i32, i32, i32
  }
  func.func @transform_4(%arg0: i32, %arg1: i32) -> (i32, i32, i32) {
    %c0_i32 = arith.constant 0 : i32
    %c0_i32_0 = arith.constant 0 : i32
    %c0_i32_1 = arith.constant 0 : i32
    %c0_i32_2 = arith.constant 0 : i32
    return %c0_i32, %c0_i32_0, %c0_i32_1 : i32, i32, i32
  }
  func.func @transform_5(%arg0: i32, %arg1: i32) -> (i32, i32, i32, i32) {
    %c0_i32 = arith.constant 0 : i32
    %c0_i32_0 = arith.constant 0 : i32
    %c0_i32_1 = arith.constant 0 : i32
    return %arg0, %c0_i32, %arg1, %c0_i32_0 : i32, i32, i32, i32
  }
  func.func @transform_6(%arg0: i32, %arg1: i32) -> (i32, i32, i32, i32) {
    %c0_i32 = arith.constant 0 : i32
    %c0_i32_0 = arith.constant 0 : i32
    %c0_i32_1 = arith.constant 0 : i32
    return %arg0, %c0_i32, %arg1, %c0_i32_0 : i32, i32, i32, i32
  }
}

module attributes {stable_mosaic.version = 11 : i64} {
  func.func @_kv_proj_kernel(%arg0: i32, %arg1: i32, %arg2: memref<1x8x16xbf16, #tpu.memory_space<vmem>>, %arg3: memref<4x8x16xbf16, #tpu.memory_space<vmem>>, %arg4: memref<4x1x8xf32, #tpu.memory_space<vmem>>, %arg5: memref<4x8x16xbf16, #tpu.memory_space<vmem>>, %arg6: memref<4x1x8xf32, #tpu.memory_space<vmem>>, %arg7: memref<1x4x8x8xbf16, #tpu.memory_space<vmem>>, %arg8: memref<1x4x8x8xbf16, #tpu.memory_space<vmem>>) attributes {dimension_semantics = [#tpu.dimension_semantics<parallel>, #tpu.dimension_semantics<parallel>], iteration_bounds = array<i64: 2, 1>, scalar_prefetch = 0 : i64, scratch_operands = 0 : i64, tpu.core_type = #tpu.core_type<tc>, window_params = [{transform_indices = @transform_0, window_bounds = array<i64: 1, 8, 16>}, {pipeline_mode = #tpu.pipeline_mode<synchronous>, transform_indices = @transform_1, window_bounds = array<i64: 4, 8, 16>}, {pipeline_mode = #tpu.pipeline_mode<synchronous>, transform_indices = @transform_2, window_bounds = array<i64: 4, 1, 8>}, {pipeline_mode = #tpu.pipeline_mode<synchronous>, transform_indices = @transform_3, window_bounds = array<i64: 4, 8, 16>}, {pipeline_mode = #tpu.pipeline_mode<synchronous>, transform_indices = @transform_4, window_bounds = array<i64: 4, 1, 8>}, {transform_indices = @transform_5, window_bounds = array<i64: 1, 4, 8, 8>}, {transform_indices = @transform_6, window_bounds = array<i64: 1, 4, 8, 8>}]} {
    %c0 = arith.constant 0 : index
    %c0_0 = arith.constant 0 : index
    %c0_1 = arith.constant 0 : index
    %0 = vector.load %arg2[%c0, %c0_0, %c0_1] : memref<1x8x16xbf16, #tpu.memory_space<vmem>>, vector<1x8x16xbf16>
    %1 = vector.shape_cast %0 : vector<1x8x16xbf16> to vector<8x16xbf16>
    %c0_2 = arith.constant 0 : index
    %c0_3 = arith.constant 0 : index
    %c0_4 = arith.constant 0 : index
    %2 = vector.load %arg3[%c0_2, %c0_3, %c0_4] : memref<4x8x16xbf16, #tpu.memory_space<vmem>>, vector<1x8x16xbf16>
    %3 = vector.shape_cast %2 : vector<1x8x16xbf16> to vector<8x16xbf16>
    %cst = arith.constant dense<0.000000e+00> : vector<8x8xf32>
    %4 = tpu.matmul %1, %3, %cst {dimension_numbers = #tpu.dot_dimension_numbers<[1], [1], [0], [0], [0, 0, 1, 0], [], []>} : vector<8x16xbf16>, vector<8x16xbf16>, vector<8x8xf32> -> vector<8x8xf32>
    %c0_5 = arith.constant 0 : index
    %c0_6 = arith.constant 0 : index
    %c0_7 = arith.constant 0 : index
    %5 = vector.load %arg4[%c0_5, %c0_6, %c0_7] : memref<4x1x8xf32, #tpu.memory_space<vmem>>, vector<1x1x8xf32>
    %6 = vector.shape_cast %5 : vector<1x1x8xf32> to vector<1x8xf32>
    %7 = vector.broadcast %6 : vector<1x8xf32> to vector<8x8xf32>
    %8 = arith.addf %4, %7 : vector<8x8xf32>
    %c0_8 = arith.constant 0 : index
    %c0_9 = arith.constant 0 : index
    %c0_10 = arith.constant 0 : index
    %9 = vector.load %arg5[%c0_8, %c0_9, %c0_10] : memref<4x8x16xbf16, #tpu.memory_space<vmem>>, vector<1x8x16xbf16>
    %10 = vector.shape_cast %9 : vector<1x8x16xbf16> to vector<8x16xbf16>
    %cst_11 = arith.constant dense<0.000000e+00> : vector<8x8xf32>
    %11 = tpu.matmul %1, %10, %cst_11 {dimension_numbers = #tpu.dot_dimension_numbers<[1], [1], [0], [0], [0, 0, 1, 0], [], []>} : vector<8x16xbf16>, vector<8x16xbf16>, vector<8x8xf32> -> vector<8x8xf32>
    %c0_12 = arith.constant 0 : index
    %c0_13 = arith.constant 0 : index
    %c0_14 = arith.constant 0 : index
    %12 = vector.load %arg6[%c0_12, %c0_13, %c0_14] : memref<4x1x8xf32, #tpu.memory_space<vmem>>, vector<1x1x8xf32>
    %13 = vector.shape_cast %12 : vector<1x1x8xf32> to vector<1x8xf32>
    %14 = vector.broadcast %13 : vector<1x8xf32> to vector<8x8xf32>
    %15 = arith.addf %11, %14 : vector<8x8xf32>
    %16 = arith.truncf %8 : vector<8x8xf32> to vector<8x8xbf16>
    %c0_15 = arith.constant 0 : index
    %c0_16 = arith.constant 0 : index
    %c0_17 = arith.constant 0 : index
    %c0_18 = arith.constant 0 : index
    %17 = vector.load %arg7[%c0_15, %c0_16, %c0_17, %c0_18] : memref<1x4x8x8xbf16, #tpu.memory_space<vmem>>, vector<1x1x8x8xbf16>
    %18 = vector.shape_cast %17 : vector<1x1x8x8xbf16> to vector<8x8xbf16>
    %19 = vector.shape_cast %16 : vector<8x8xbf16> to vector<1x1x8x8xbf16>
    tpu.vector_store %arg7[%c0_15, %c0_16, %c0_17, %c0_18], %19 {strides = array<i32>} : memref<1x4x8x8xbf16, #tpu.memory_space<vmem>>, vector<1x1x8x8xbf16>,
    %20 = arith.truncf %15 : vector<8x8xf32> to vector<8x8xbf16>
    %c0_19 = arith.constant 0 : index
    %c0_20 = arith.constant 0 : index
    %c0_21 = arith.constant 0 : index
    %c0_22 = arith.constant 0 : index
    %21 = vector.load %arg8[%c0_19, %c0_20, %c0_21, %c0_22] : memref<1x4x8x8xbf16, #tpu.memory_space<vmem>>, vector<1x1x8x8xbf16>
    %22 = vector.shape_cast %21 : vector<1x1x8x8xbf16> to vector<8x8xbf16>
    %23 = vector.shape_cast %20 : vector<8x8xbf16> to vector<1x1x8x8xbf16>
    tpu.vector_store %arg8[%c0_19, %c0_20, %c0_21, %c0_22], %23 {strides = array<i32>} : memref<1x4x8x8xbf16, #tpu.memory_space<vmem>>, vector<1x1x8x8xbf16>,
    %c1 = arith.constant 1 : index
    %c0_23 = arith.constant 0 : index
    %c0_24 = arith.constant 0 : index
    %24 = vector.load %arg3[%c1, %c0_23, %c0_24] : memref<4x8x16xbf16, #tpu.memory_space<vmem>>, vector<1x8x16xbf16>
    %25 = vector.shape_cast %24 : vector<1x8x16xbf16> to vector<8x16xbf16>
    %cst_25 = arith.constant dense<0.000000e+00> : vector<8x8xf32>
    %26 = tpu.matmul %1, %25, %cst_25 {dimension_numbers = #tpu.dot_dimension_numbers<[1], [1], [0], [0], [0, 0, 1, 0], [], []>} : vector<8x16xbf16>, vector<8x16xbf16>, vector<8x8xf32> -> vector<8x8xf32>
    %c1_26 = arith.constant 1 : index
    %c0_27 = arith.constant 0 : index
    %c0_28 = arith.constant 0 : index
    %27 = vector.load %arg4[%c1_26, %c0_27, %c0_28] : memref<4x1x8xf32, #tpu.memory_space<vmem>>, vector<1x1x8xf32>
    %28 = vector.shape_cast %27 : vector<1x1x8xf32> to vector<1x8xf32>
    %29 = vector.broadcast %28 : vector<1x8xf32> to vector<8x8xf32>
    %30 = arith.addf %26, %29 : vector<8x8xf32>
    %c1_29 = arith.constant 1 : index
    %c0_30 = arith.constant 0 : index
    %c0_31 = arith.constant 0 : index
    %31 = vector.load %arg5[%c1_29, %c0_30, %c0_31] : memref<4x8x16xbf16, #tpu.memory_space<vmem>>, vector<1x8x16xbf16>
    %32 = vector.shape_cast %31 : vector<1x8x16xbf16> to vector<8x16xbf16>
    %cst_32 = arith.constant dense<0.000000e+00> : vector<8x8xf32>
    %33 = tpu.matmul %1, %32, %cst_32 {dimension_numbers = #tpu.dot_dimension_numbers<[1], [1], [0], [0], [0, 0, 1, 0], [], []>} : vector<8x16xbf16>, vector<8x16xbf16>, vector<8x8xf32> -> vector<8x8xf32>
    %c1_33 = arith.constant 1 : index
    %c0_34 = arith.constant 0 : index
    %c0_35 = arith.constant 0 : index
    %34 = vector.load %arg6[%c1_33, %c0_34, %c0_35] : memref<4x1x8xf32, #tpu.memory_space<vmem>>, vector<1x1x8xf32>
    %35 = vector.shape_cast %34 : vector<1x1x8xf32> to vector<1x8xf32>
    %36 = vector.broadcast %35 : vector<1x8xf32> to vector<8x8xf32>
    %37 = arith.addf %33, %36 : vector<8x8xf32>
    %38 = arith.truncf %30 : vector<8x8xf32> to vector<8x8xbf16>
    %c0_36 = arith.constant 0 : index
    %c1_37 = arith.constant 1 : index
    %c0_38 = arith.constant 0 : index
    %c0_39 = arith.constant 0 : index
    %39 = vector.load %arg7[%c0_36, %c1_37, %c0_38, %c0_39] : memref<1x4x8x8xbf16, #tpu.memory_space<vmem>>, vector<1x1x8x8xbf16>
    %40 = vector.shape_cast %39 : vector<1x1x8x8xbf16> to vector<8x8xbf16>
    %41 = vector.shape_cast %38 : vector<8x8xbf16> to vector<1x1x8x8xbf16>
    tpu.vector_store %arg7[%c0_36, %c1_37, %c0_38, %c0_39], %41 {strides = array<i32>} : memref<1x4x8x8xbf16, #tpu.memory_space<vmem>>, vector<1x1x8x8xbf16>,
    %42 = arith.truncf %37 : vector<8x8xf32> to vector<8x8xbf16>
    %c0_40 = arith.constant 0 : index
    %c1_41 = arith.constant 1 : index
    %c0_42 = arith.constant 0 : index
    %c0_43 = arith.constant 0 : index
    %43 = vector.load %arg8[%c0_40, %c1_41, %c0_42, %c0_43] : memref<1x4x8x8xbf16, #tpu.memory_space<vmem>>, vector<1x1x8x8xbf16>
    %44 = vector.shape_cast %43 : vector<1x1x8x8xbf16> to vector<8x8xbf16>
    %45 = vector.shape_cast %42 : vector<8x8xbf16> to vector<1x1x8x8xbf16>
    tpu.vector_store %arg8[%c0_40, %c1_41, %c0_42, %c0_43], %45 {strides = array<i32>} : memref<1x4x8x8xbf16, #tpu.memory_space<vmem>>, vector<1x1x8x8xbf16>,
    %c2 = arith.constant 2 : index
    %c0_44 = arith.constant 0 : index
    %c0_45 = arith.constant 0 : index
    %46 = vector.load %arg3[%c2, %c0_44, %c0_45] : memref<4x8x16xbf16, #tpu.memory_space<vmem>>, vector<1x8x16xbf16>
    %47 = vector.shape_cast %46 : vector<1x8x16xbf16> to vector<8x16xbf16>
    %cst_46 = arith.constant dense<0.000000e+00> : vector<8x8xf32>
    %48 = tpu.matmul %1, %47, %cst_46 {dimension_numbers = #tpu.dot_dimension_numbers<[1], [1], [0], [0], [0, 0, 1, 0], [], []>} : vector<8x16xbf16>, vector<8x16xbf16>, vector<8x8xf32> -> vector<8x8xf32>
    %c2_47 = arith.constant 2 : index
    %c0_48 = arith.constant 0 : index
    %c0_49 = arith.constant 0 : index
    %49 = vector.load %arg4[%c2_47, %c0_48, %c0_49] : memref<4x1x8xf32, #tpu.memory_space<vmem>>, vector<1x1x8xf32>
    %50 = vector.shape_cast %49 : vector<1x1x8xf32> to vector<1x8xf32>
    %51 = vector.broadcast %50 : vector<1x8xf32> to vector<8x8xf32>
    %52 = arith.addf %48, %51 : vector<8x8xf32>
    %c2_50 = arith.constant 2 : index
    %c0_51 = arith.constant 0 : index
    %c0_52 = arith.constant 0 : index
    %53 = vector.load %arg5[%c2_50, %c0_51, %c0_52] : memref<4x8x16xbf16, #tpu.memory_space<vmem>>, vector<1x8x16xbf16>
    %54 = vector.shape_cast %53 : vector<1x8x16xbf16> to vector<8x16xbf16>
    %cst_53 = arith.constant dense<0.000000e+00> : vector<8x8xf32>
    %55 = tpu.matmul %1, %54, %cst_53 {dimension_numbers = #tpu.dot_dimension_numbers<[1], [1], [0], [0], [0, 0, 1, 0], [], []>} : vector<8x16xbf16>, vector<8x16xbf16>, vector<8x8xf32> -> vector<8x8xf32>
    %c2_54 = arith.constant 2 : index
    %c0_55 = arith.constant 0 : index
    %c0_56 = arith.constant 0 : index
    %56 = vector.load %arg6[%c2_54, %c0_55, %c0_56] : memref<4x1x8xf32, #tpu.memory_space<vmem>>, vector<1x1x8xf32>
    %57 = vector.shape_cast %56 : vector<1x1x8xf32> to vector<1x8xf32>
    %58 = vector.broadcast %57 : vector<1x8xf32> to vector<8x8xf32>
    %59 = arith.addf %55, %58 : vector<8x8xf32>
    %60 = arith.truncf %52 : vector<8x8xf32> to vector<8x8xbf16>
    %c0_57 = arith.constant 0 : index
    %c2_58 = arith.constant 2 : index
    %c0_59 = arith.constant 0 : index
    %c0_60 = arith.constant 0 : index
    %61 = vector.load %arg7[%c0_57, %c2_58, %c0_59, %c0_60] : memref<1x4x8x8xbf16, #tpu.memory_space<vmem>>, vector<1x1x8x8xbf16>
    %62 = vector.shape_cast %61 : vector<1x1x8x8xbf16> to vector<8x8xbf16>
    %63 = vector.shape_cast %60 : vector<8x8xbf16> to vector<1x1x8x8xbf16>
    tpu.vector_store %arg7[%c0_57, %c2_58, %c0_59, %c0_60], %63 {strides = array<i32>} : memref<1x4x8x8xbf16, #tpu.memory_space<vmem>>, vector<1x1x8x8xbf16>,
    %64 = arith.truncf %59 : vector<8x8xf32> to vector<8x8xbf16>
    %c0_61 = arith.constant 0 : index
    %c2_62 = arith.constant 2 : index
    %c0_63 = arith.constant 0 : index
    %c0_64 = arith.constant 0 : index
    %65 = vector.load %arg8[%c0_61, %c2_62, %c0_63, %c0_64] : memref<1x4x8x8xbf16, #tpu.memory_space<vmem>>, vector<1x1x8x8xbf16>
    %66 = vector.shape_cast %65 : vector<1x1x8x8xbf16> to vector<8x8xbf16>
    %67 = vector.shape_cast %64 : vector<8x8xbf16> to vector<1x1x8x8xbf16>
    tpu.vector_store %arg8[%c0_61, %c2_62, %c0_63, %c0_64], %67 {strides = array<i32>} : memref<1x4x8x8xbf16, #tpu.memory_space<vmem>>, vector<1x1x8x8xbf16>,
    %c3 = arith.constant 3 : index
    %c0_65 = arith.constant 0 : index
    %c0_66 = arith.constant 0 : index
    %68 = vector.load %arg3[%c3, %c0_65, %c0_66] : memref<4x8x16xbf16, #tpu.memory_space<vmem>>, vector<1x8x16xbf16>
    %69 = vector.shape_cast %68 : vector<1x8x16xbf16> to vector<8x16xbf16>
    %cst_67 = arith.constant dense<0.000000e+00> : vector<8x8xf32>
    %70 = tpu.matmul %1, %69, %cst_67 {dimension_numbers = #tpu.dot_dimension_numbers<[1], [1], [0], [0], [0, 0, 1, 0], [], []>} : vector<8x16xbf16>, vector<8x16xbf16>, vector<8x8xf32> -> vector<8x8xf32>
    %c3_68 = arith.constant 3 : index
    %c0_69 = arith.constant 0 : index
    %c0_70 = arith.constant 0 : index
    %71 = vector.load %arg4[%c3_68, %c0_69, %c0_70] : memref<4x1x8xf32, #tpu.memory_space<vmem>>, vector<1x1x8xf32>
    %72 = vector.shape_cast %71 : vector<1x1x8xf32> to vector<1x8xf32>
    %73 = vector.broadcast %72 : vector<1x8xf32> to vector<8x8xf32>
    %74 = arith.addf %70, %73 : vector<8x8xf32>
    %c3_71 = arith.constant 3 : index
    %c0_72 = arith.constant 0 : index
    %c0_73 = arith.constant 0 : index
    %75 = vector.load %arg5[%c3_71, %c0_72, %c0_73] : memref<4x8x16xbf16, #tpu.memory_space<vmem>>, vector<1x8x16xbf16>
    %76 = vector.shape_cast %75 : vector<1x8x16xbf16> to vector<8x16xbf16>
    %cst_74 = arith.constant dense<0.000000e+00> : vector<8x8xf32>
    %77 = tpu.matmul %1, %76, %cst_74 {dimension_numbers = #tpu.dot_dimension_numbers<[1], [1], [0], [0], [0, 0, 1, 0], [], []>} : vector<8x16xbf16>, vector<8x16xbf16>, vector<8x8xf32> -> vector<8x8xf32>
    %c3_75 = arith.constant 3 : index
    %c0_76 = arith.constant 0 : index
    %c0_77 = arith.constant 0 : index
    %78 = vector.load %arg6[%c3_75, %c0_76, %c0_77] : memref<4x1x8xf32, #tpu.memory_space<vmem>>, vector<1x1x8xf32>
    %79 = vector.shape_cast %78 : vector<1x1x8xf32> to vector<1x8xf32>
    %80 = vector.broadcast %79 : vector<1x8xf32> to vector<8x8xf32>
    %81 = arith.addf %77, %80 : vector<8x8xf32>
    %82 = arith.truncf %74 : vector<8x8xf32> to vector<8x8xbf16>
    %c0_78 = arith.constant 0 : index
    %c3_79 = arith.constant 3 : index
    %c0_80 = arith.constant 0 : index
    %c0_81 = arith.constant 0 : index
    %83 = vector.load %arg7[%c0_78, %c3_79, %c0_80, %c0_81] : memref<1x4x8x8xbf16, #tpu.memory_space<vmem>>, vector<1x1x8x8xbf16>
    %84 = vector.shape_cast %83 : vector<1x1x8x8xbf16> to vector<8x8xbf16>
    %85 = vector.shape_cast %82 : vector<8x8xbf16> to vector<1x1x8x8xbf16>
    tpu.vector_store %arg7[%c0_78, %c3_79, %c0_80, %c0_81], %85 {strides = array<i32>} : memref<1x4x8x8xbf16, #tpu.memory_space<vmem>>, vector<1x1x8x8xbf16>,
    %86 = arith.truncf %81 : vector<8x8xf32> to vector<8x8xbf16>
    %c0_82 = arith.constant 0 : index
    %c3_83 = arith.constant 3 : index
    %c0_84 = arith.constant 0 : index
    %c0_85 = arith.constant 0 : index
    %87 = vector.load %arg8[%c0_82, %c3_83, %c0_84, %c0_85] : memref<1x4x8x8xbf16, #tpu.memory_space<vmem>>, vector<1x1x8x8xbf16>
    %88 = vector.shape_cast %87 : vector<1x1x8x8xbf16> to vector<8x8xbf16>
    %89 = vector.shape_cast %86 : vector<8x8xbf16> to vector<1x1x8x8xbf16>
    tpu.vector_store %arg8[%c0_82, %c3_83, %c0_84, %c0_85], %89 {strides = array<i32>} : memref<1x4x8x8xbf16, #tpu.memory_space<vmem>>, vector<1x1x8x8xbf16>,
    return
  }
  func.func @transform_0(%arg0: i32, %arg1: i32) -> (i32, i32, i32) {
    %c0_i32 = arith.constant 0 : i32
    %c0_i32_0 = arith.constant 0 : i32
    return %arg0, %arg1, %c0_i32 : i32, i32, i32
  }
  func.func @transform_1(%arg0: i32, %arg1: i32) -> (i32, i32, i32) {
    %c0_i32 = arith.constant 0 : i32
    %c0_i32_0 = arith.constant 0 : i32
    %c0_i32_1 = arith.constant 0 : i32
    %c0_i32_2 = arith.constant 0 : i32
    return %c0_i32, %c0_i32_0, %c0_i32_1 : i32, i32, i32
  }
  func.func @transform_2(%arg0: i32, %arg1: i32) -> (i32, i32, i32) {
    %c0_i32 = arith.constant 0 : i32
    %c0_i32_0 = arith.constant 0 : i32
    %c0_i32_1 = arith.constant 0 : i32
    %c0_i32_2 = arith.constant 0 : i32
    return %c0_i32, %c0_i32_0, %c0_i32_1 : i32, i32, i32
  }
  func.func @transform_3(%arg0: i32, %arg1: i32) -> (i32, i32, i32) {
    %c0_i32 = arith.constant 0 : i32
    %c0_i32_0 = arith.constant 0 : i32
    %c0_i32_1 = arith.constant 0 : i32
    %c0_i32_2 = arith.constant 0 : i32
    return %c0_i32, %c0_i32_0, %c0_i32_1 : i32, i32, i32
  }
  func.func @transform_4(%arg0: i32, %arg1: i32) -> (i32, i32, i32) {
    %c0_i32 = arith.constant 0 : i32
    %c0_i32_0 = arith.constant 0 : i32
    %c0_i32_1 = arith.constant 0 : i32
    %c0_i32_2 = arith.constant 0 : i32
    return %c0_i32, %c0_i32_0, %c0_i32_1 : i32, i32, i32
  }
  func.func @transform_5(%arg0: i32, %arg1: i32) -> (i32, i32, i32, i32) {
    %c0_i32 = arith.constant 0 : i32
    %c0_i32_0 = arith.constant 0 : i32
    %c0_i32_1 = arith.constant 0 : i32
    return %arg0, %c0_i32, %arg1, %c0_i32_0 : i32, i32, i32, i32
  }
  func.func @transform_6(%arg0: i32, %arg1: i32) -> (i32, i32, i32, i32) {
    %c0_i32 = arith.constant 0 : i32
    %c0_i32_0 = arith.constant 0 : i32
    %c0_i32_1 = arith.constant 0 : i32
    return %arg0, %c0_i32, %arg1, %c0_i32_0 : i32, i32, i32, i32
  }
}

</mosaic_0001>

<llo_original>
// kernel: tpu_custom_call.1
$region0: #{tpu_custom_call.1}
  #allocation0 [shape = 'u32[]', space=smem, size = 0x4, offset = 0x4, fixed_abs, tag = 'smem constant byte address 0x4 - core index']
  #allocation1 [shape = 'u32[144,128]{1,0:T(1,128)}', space=vmem, size = 0x12000, scoped, tag = 'internal scratch']
  %s0 = inlined_call_operand.hbm [shape: bf16[2,8,16], index: 0, kind: input, shape index: {}]
  %s1 = inlined_call_operand.hbm [shape: bf16[4,8,16], index: 1, kind: input, shape index: {}]
  %s2 = inlined_call_operand.vmem [shape: f32[4,1,8], index: 2, kind: input, shape index: {}]
  %s3 = inlined_call_operand.hbm [shape: bf16[4,8,16], index: 3, kind: input, shape index: {}]
  %s4 = inlined_call_operand.vmem [shape: f32[4,1,8], index: 4, kind: input, shape index: {}]
  %s5 = inlined_call_operand.hbm [shape: bf16[2,4,8,8], index: 5, kind: output, shape index: {0}]
  %s6 = inlined_call_operand.hbm [shape: bf16[2,4,8,8], index: 6, kind: output, shape index: {1}]
  %7 = xla_tuple %s5, %s6
  %s8 = sld [smem:[#allocation0]]
  $region73: #{tpu_custom_call.1} parent=0
    _
  %s10 = ssub.s32 1, %s8
  %s11 = scalar_select 0, %s10, %s8
  $region1: #{tpu_custom_call.1} parent=0
    #allocation2 [shape = 'u8[4096]{0}', space=vmem, size = 0x1000, scoped, tag = 'input window, operand 0']
    #allocation3 [shape = 's32[2]{0}', space=sflag, size = 0x8, scoped, tag = 'scoped memory for tpu_custom_call.1']
    #allocation4 [shape = 's32[2]{0}', space=sflag, size = 0x8, scoped, tag = 'scoped memory for tpu_custom_call.1']
    #allocation5 [shape = 'u8[8192]{0}', space=vmem, size = 0x2000, scoped, tag = 'input window, operand 1, single buffered']
    #allocation6 [shape = 's32[1]{0}', space=sflag, size = 0x4, scoped, tag = 'scoped memory for tpu_custom_call.1']
    #allocation7 [shape = 'u8[8192]{0}', space=vmem, size = 0x2000, scoped, tag = 'input window, operand 3, single buffered']
    #allocation8 [shape = 'u8[16384]{0}', space=vmem, size = 0x4000, scoped, tag = 'output window, operand 0']
    #allocation9 [shape = 'u8[16384]{0}', space=vmem, size = 0x4000, scoped, tag = 'output window, operand 1']
    #allocation10 [shape = 's32[2]{0}', space=sflag, size = 0x8, scoped, tag = 'scoped memory for tpu_custom_call.1']
    %12 = vsyncpa [#allocation3], 0
    %s13 = scalar_lea.sflag [#allocation3], 1
    %14 = vsyncpa %s13, 0
    %15 = vsyncpa [#allocation6], 0
    %16 = vsyncpa [#allocation4], 0
    %s17 = scalar_lea.sflag [#allocation4], 1
    %18 = vsyncpa %s17, 0
    %19 = vsyncpa [#allocation10], 0
    %s20 = scalar_lea.sflag [#allocation10], 1
    %21 = vsyncpa %s20, 0
    loop: start=0, step=1, limit=4
    $region2: #{tpu_custom_call.1} parent=1 // loop_pre_header
      _
    $region3: #{tpu_custom_call.1} parent=1 // loop_header
      %s23 = sphi 0, %s27
      %p24 = scmp.ge.s32.totalorder %s23, 4
      %s30 = sphi 0, %s42
      %s31 = sphi 0, %s38
      %s32 = sphi 0, %s30
      %s33 = sphi 0, %s31
      %s34 = sphi 0, %s32
      %s35 = sphi 0, %s33
      %s47 = sphi 0, %s49
      %s50 = sphi 0, %s47
      %s51 = sphi 0, %s50
      %s67 = sphi 0, %s51
      %s71 = sphi 0, %s71
      %s73 = sphi 0, %s71
      %s74 = sphi 0, %s73
      %s88 = sphi 0, %s74
      %s92 = sphi 0, %s92
      %s94 = sphi 0, %s92
      %s95 = sphi 0, %s94
      %s109 = sphi 0, %s95
      %s113 = sphi 0, %s113
      %s115 = sphi 0, %s113
      %s116 = sphi 0, %s115
      %s130 = sphi 0, %s116
      %s134 = sphi 0, %s134
      %s136 = sphi 0, %s134
      %s137 = sphi 0, %s136
      %s151 = sphi 0, %s137
      %s159 = sphi 0, %s161
      %s162 = sphi 0, %s159
      %s163 = sphi 0, %s162
      %s179 = sphi 0, %s163
      %s187 = sphi 0, %s189
      %s190 = sphi 0, %s187
      %s191 = sphi 0, %s190
      %s207 = sphi 0, %s191
    $region4: #{tpu_custom_call.1} parent=1 // loop_header_branch
      %26 = sbr.rel (%p24) target = $region8
    $region5: #{tpu_custom_call.1} parent=1 // loop_body
      %s28 = ssub.s32 %s23, 1
      %s29 = ssub.s32 %s23, 2
      %s36 = sadd.s32 1, %s31
      %p37 = scmp.ge.s32.totalorder %s36, 1
      %s38 = scalar_select %p37, 0, %s36
      %s39 = sadd.s32 1, %s30
      %s40 = scalar_select %p37, %s39, %s30
      %p41 = scmp.ge.s32.totalorder %s40, 2
      %s42 = scalar_select %p41, 0, %s40
      %s43 = ssub.s32 %s30, %s42
      %s44 = ssub.s32 %s31, %s38
      %s45 = sor.u32 %s43, %s44
      %p46 = scmp.eq.s32.totalorder %s45, 0
      %s48 = sadd.s32 %s47, 1
      %s49 = scalar_select %p46, %s47, %s48
      %p52 = pneg %p46
      %p53 = scmp.eq.s32.totalorder %s23, 1
      %p54 = por %p52, %p53
      %p55 = scmp.ne.s32.totalorder %s47, %s50
      %p56 = scmp.eq.s32.totalorder %s23, 0
      %p57 = por %p55, %p56
      %p58 = scmp.ne.s32.totalorder %s47, %s50
      %p59 = scmp.eq.s32.totalorder %s28, 1
      %p60 = por %p58, %p59
      %p61 = scmp.ne.s32.totalorder %s50, %s51
      %p62 = scmp.eq.s32.totalorder %s28, 0
      %p63 = por %p61, %p62
      %p64 = scmp.ne.s32.totalorder %s50, %s51
      %p65 = scmp.eq.s32.totalorder %s29, 1
      %p66 = por %p64, %p65
      %p68 = scmp.ne.s32.totalorder %s51, %s67
      %p69 = scmp.eq.s32.totalorder %s29, 0
      %p70 = por %p68, %p69
      %s72 = sadd.s32 %s71, 1
      %p75 = scmp.eq.s32.totalorder %s23, 1
      %p76 = scmp.ne.s32.totalorder %s71, %s73
      %p77 = scmp.eq.s32.totalorder %s23, 0
      %p78 = por %p76, %p77
      %p79 = scmp.ne.s32.totalorder %s71, %s73
      %p80 = scmp.eq.s32.totalorder %s28, 1
      %p81 = por %p79, %p80
      %p82 = scmp.ne.s32.totalorder %s73, %s74
      %p83 = scmp.eq.s32.totalorder %s28, 0
      %p84 = por %p82, %p83
      %p85 = scmp.ne.s32.totalorder %s73, %s74
      %p86 = scmp.eq.s32.totalorder %s29, 1
      %p87 = por %p85, %p86
      %p89 = scmp.ne.s32.totalorder %s74, %s88
      %p90 = scmp.eq.s32.totalorder %s29, 0
      %p91 = por %p89, %p90
      %s93 = sadd.s32 %s92, 1
      %p96 = scmp.eq.s32.totalorder %s23, 1
      %p97 = scmp.ne.s32.totalorder %s92, %s94
      %p98 = scmp.eq.s32.totalorder %s23, 0
      %p99 = por %p97, %p98
      %p100 = scmp.ne.s32.totalorder %s92, %s94
      %p101 = scmp.eq.s32.totalorder %s28, 1
      %p102 = por %p100, %p101
      %p103 = scmp.ne.s32.totalorder %s94, %s95
      %p104 = scmp.eq.s32.totalorder %s28, 0
      %p105 = por %p103, %p104
      %p106 = scmp.ne.s32.totalorder %s94, %s95
      %p107 = scmp.eq.s32.totalorder %s29, 1
      %p108 = por %p106, %p107
      %p110 = scmp.ne.s32.totalorder %s95, %s109
      %p111 = scmp.eq.s32.totalorder %s29, 0
      %p112 = por %p110, %p111
      %s114 = sadd.s32 %s113, 1
      %p117 = scmp.eq.s32.totalorder %s23, 1
      %p118 = scmp.ne.s32.totalorder %s113, %s115
      %p119 = scmp.eq.s32.totalorder %s23, 0
      %p120 = por %p118, %p119
      %p121 = scmp.ne.s32.totalorder %s113, %s115
      %p122 = scmp.eq.s32.totalorder %s28, 1
      %p123 = por %p121, %p122
      %p124 = scmp.ne.s32.totalorder %s115, %s116
      %p125 = scmp.eq.s32.totalorder %s28, 0
      %p126 = por %p124, %p125
      %p127 = scmp.ne.s32.totalorder %s115, %s116
      %p128 = scmp.eq.s32.totalorder %s29, 1
      %p129 = por %p127, %p128
      %p131 = scmp.ne.s32.totalorder %s116, %s130
      %p132 = scmp.eq.s32.totalorder %s29, 0
      %p133 = por %p131, %p132
      %s135 = sadd.s32 %s134, 1
      %p138 = scmp.eq.s32.totalorder %s23, 1
      %p139 = scmp.ne.s32.totalorder %s134, %s136
      %p140 = scmp.eq.s32.totalorder %s23, 0
      %p141 = por %p139, %p140
      %p142 = scmp.ne.s32.totalorder %s134, %s136
      %p143 = scmp.eq.s32.totalorder %s28, 1
      %p144 = por %p142, %p143
      %p145 = scmp.ne.s32.totalorder %s136, %s137
      %p146 = scmp.eq.s32.totalorder %s28, 0
      %p147 = por %p145, %p146
      %p148 = scmp.ne.s32.totalorder %s136, %s137
      %p149 = scmp.eq.s32.totalorder %s29, 1
      %p150 = por %p148, %p149
      %p152 = scmp.ne.s32.totalorder %s137, %s151
      %p153 = scmp.eq.s32.totalorder %s29, 0
      %p154 = por %p152, %p153
      %s155 = ssub.s32 %s30, %s42
      %s156 = ssub.s32 %s31, %s38
      %s157 = sor.u32 %s155, %s156
      %p158 = scmp.eq.s32.totalorder %s157, 0
      %s160 = sadd.s32 %s159, 1
      %s161 = scalar_select %p158, %s159, %s160
      %p164 = pneg %p158
      %p165 = scmp.eq.s32.totalorder %s23, 1
      %p166 = por %p164, %p165
      %p167 = scmp.ne.s32.totalorder %s159, %s162
      %p168 = scmp.eq.s32.totalorder %s23, 0
      %p169 = por %p167, %p168
      %p170 = scmp.ne.s32.totalorder %s159, %s162
      %p171 = scmp.eq.s32.totalorder %s28, 1
      %p172 = por %p170, %p171
      %p173 = scmp.ne.s32.totalorder %s162, %s163
      %p174 = scmp.eq.s32.totalorder %s28, 0
      %p175 = por %p173, %p174
      %p176 = scmp.ne.s32.totalorder %s162, %s163
      %p177 = scmp.eq.s32.totalorder %s29, 1
      %p178 = por %p176, %p177
      %p180 = scmp.ne.s32.totalorder %s163, %s179
      %p181 = scmp.eq.s32.totalorder %s29, 0
      %p182 = por %p180, %p181
      %s183 = ssub.s32 %s30, %s42
      %s184 = ssub.s32 %s31, %s38
      %s185 = sor.u32 %s183, %s184
      %p186 = scmp.eq.s32.totalorder %s185, 0
      %s188 = sadd.s32 %s187, 1
      %s189 = scalar_select %p186, %s187, %s188
      %p192 = pneg %p186
      %p193 = scmp.eq.s32.totalorder %s23, 1
      %p194 = por %p192, %p193
      %p195 = scmp.ne.s32.totalorder %s187, %s190
      %p196 = scmp.eq.s32.totalorder %s23, 0
      %p197 = por %p195, %p196
      %p198 = scmp.ne.s32.totalorder %s187, %s190
      %p199 = scmp.eq.s32.totalorder %s28, 1
      %p200 = por %p198, %p199
      %p201 = scmp.ne.s32.totalorder %s190, %s191
      %p202 = scmp.eq.s32.totalorder %s28, 0
      %p203 = por %p201, %p202
      %p204 = scmp.ne.s32.totalorder %s190, %s191
      %p205 = scmp.eq.s32.totalorder %s29, 1
      %p206 = por %p204, %p205
      %p208 = scmp.ne.s32.totalorder %s191, %s207
      %p209 = scmp.eq.s32.totalorder %s29, 0
      %p210 = por %p208, %p209
      %p211 = scmp.le.s32.totalorder 1, %s23
      %p212 = scmp.lt.s32.totalorder %s23, 3
      %p213 = pnand %p211, %p212
      %p214 = pneg %p213
      // Predicated region
      $region9: #{tpu_custom_call.1} parent=5 // pred_check
        _
      $region10: #{tpu_custom_call.1} parent=5 // pred_check_branch
        %216 = sbr.rel (%p213) target = $region12
      $region11: #{tpu_custom_call.1} parent=5 // pred_region
        %s217 = ssub.s32 %s23, 1
        // Predicated region
        $region13: #{tpu_custom_call.1} parent=11 // pred_check
          %p218 = pneg %p84
        $region14: #{tpu_custom_call.1} parent=11 // pred_check_branch
          %220 = sbr.rel (%p218) target = $region16
        $region15: #{tpu_custom_call.1} parent=11 // pred_region
          %s222 = ssub.s32 256, 256
          %223 = vsyncadd [#allocation6], %s222
          %s224 = sshll.u32 [#allocation5], 4
          %s225 = int_to_ptr.vmem [resolvable:$true] %s224
          %230 = dma.hbm_to_vmem [thread:$0]  %s1, 256, %s225, [#allocation6], 64, 64, 4
        $region16: #{tpu_custom_call.1} parent=11 // pred_fallthru
          _
        // Predicated region
        $region17: #{tpu_custom_call.1} parent=11 // pred_check
          %p231 = pneg %p105
        $region18: #{tpu_custom_call.1} parent=11 // pred_check_branch
          %233 = sbr.rel (%p231) target = $region20
        $region19: #{tpu_custom_call.1} parent=11 // pred_region
          _
        $region20: #{tpu_custom_call.1} parent=11 // pred_fallthru
          _
        // Predicated region
        $region21: #{tpu_custom_call.1} parent=11 // pred_check
          %p234 = pneg %p126
        $region22: #{tpu_custom_call.1} parent=11 // pred_check_branch
          %236 = sbr.rel (%p234) target = $region24
        $region23: #{tpu_custom_call.1} parent=11 // pred_region
          %s238 = ssub.s32 256, 256
          %239 = vsyncadd [#allocation6], %s238
          %s240 = sshll.u32 [#allocation7], 4
          %s241 = int_to_ptr.vmem [resolvable:$true] %s240
          %246 = dma.hbm_to_vmem [thread:$0]  %s3, 256, %s241, [#allocation6], 64, 64, 4
        $region24: #{tpu_custom_call.1} parent=11 // pred_fallthru
          _
        // Predicated region
        $region25: #{tpu_custom_call.1} parent=11 // pred_check
          %p247 = pneg %p147
        $region26: #{tpu_custom_call.1} parent=11 // pred_check_branch
          %249 = sbr.rel (%p247) target = $region28
        $region27: #{tpu_custom_call.1} parent=11 // pred_region
          _
        $region28: #{tpu_custom_call.1} parent=11 // pred_fallthru
          _
      $region12: #{tpu_custom_call.1} parent=5 // pred_fallthru
        _
      %p250 = scmp.lt.s32.totalorder %s23, 2
      // Predicated region
      $region29: #{tpu_custom_call.1} parent=5 // pred_check
        %p251 = pneg %p250
      $region30: #{tpu_custom_call.1} parent=5 // pred_check_branch
        %253 = sbr.rel (%p251) target = $region32
      $region31: #{tpu_custom_call.1} parent=5 // pred_region
        // Predicated region
        $region33: #{tpu_custom_call.1} parent=31 // pred_check
          %p254 = pneg %p57
        $region34: #{tpu_custom_call.1} parent=31 // pred_check_branch
          %256 = sbr.rel (%p254) target = $region36
        $region35: #{tpu_custom_call.1} parent=31 // pred_region
          %s257 = sand.u32 %s47, 1
          %s258 = scalar_lea.sflag [#allocation3], %s257
          %s259 = sand.u32 %s47, 1
          %s260 = smul.addr %s259, 4
          %s261 = scalar_lea.vmem [#allocation2], %s260
          %s263 = ssub.s32 64, 64
          %264 = vsyncadd %s258, %s263
          %s265 = sadd.s32 %s31, %s30
          %s266 = smul.addr %s265, 64
          %s267 = scalar_lea.hbm %s0, %s266
          %s269 = sshll.u32 %s261, 4
          %s270 = int_to_ptr.vmem [resolvable:$true] %s269
          %272 = dma.hbm_to_vmem [thread:$0]  %s267, 64, %s270, %s258
        $region36: #{tpu_custom_call.1} parent=31 // pred_fallthru
          _
      $region32: #{tpu_custom_call.1} parent=5 // pred_fallthru
        _
      %p273 = scmp.le.s32.totalorder 1, %s23
      %p274 = scmp.lt.s32.totalorder %s23, 3
      %p275 = pnand %p273, %p274
      %p276 = pneg %p275
      // Predicated region
      $region37: #{tpu_custom_call.1} parent=5 // pred_check
        _
      $region38: #{tpu_custom_call.1} parent=5 // pred_check_branch
        %278 = sbr.rel (%p275) target = $region40
      $region39: #{tpu_custom_call.1} parent=5 // pred_region
        %s279 = ssub.s32 %s23, 1
        %s280 = sand.u32 %s50, 1
        %s281 = scalar_lea.sflag [#allocation3], %s280
        %s282 = sand.u32 %s50, 1
        %s283 = smul.addr %s282, 4
        %s284 = scalar_lea.vmem [#allocation2], %s283
        // Predicated region
        $region41: #{tpu_custom_call.1} parent=39 // pred_check
          %p285 = pneg %p63
        $region42: #{tpu_custom_call.1} parent=39 // pred_check_branch
          %287 = sbr.rel (%p285) target = $region44
        $region43: #{tpu_custom_call.1} parent=39 // pred_region
          %288 = dma.done %s281, 64
        $region44: #{tpu_custom_call.1} parent=39 // pred_fallthru
          _
        // Predicated region
        $region45: #{tpu_custom_call.1} parent=39 // pred_check
          %p289 = pneg %p84
        $region46: #{tpu_custom_call.1} parent=39 // pred_check_branch
          %291 = sbr.rel (%p289) target = $region48
        $region47: #{tpu_custom_call.1} parent=39 // pred_region
          %292 = dma.done [#allocation6], 256
        $region48: #{tpu_custom_call.1} parent=39 // pred_fallthru
          _
        // Predicated region
        $region49: #{tpu_custom_call.1} parent=39 // pred_check
          %p293 = pneg %p126
        $region50: #{tpu_custom_call.1} parent=39 // pred_check_branch
          %295 = sbr.rel (%p293) target = $region52
        $region51: #{tpu_custom_call.1} parent=39 // pred_region
          %296 = dma.done [#allocation6], 256
        $region52: #{tpu_custom_call.1} parent=39 // pred_fallthru
          _
        %s297 = sand.u32 %s50, 1
        %s298 = scalar_lea.sflag [#allocation3], %s297
        %s299 = sand.u32 %s50, 1
        %s300 = smul.addr %s299, 4
        %s301 = scalar_lea.vmem [#allocation2], %s300
        %p302 = pneg %p63
        %p303 = pneg %p60
        %p304 = pneg %p84
        %p305 = pneg %p81
        %p306 = pneg %p105
        %p307 = pneg %p102
        %p308 = pneg %p126
        %p309 = pneg %p123
        %p310 = pneg %p147
        %p311 = pneg %p144
        %p312 = pneg %p175
        %p313 = pneg %p172
        %s314 = sand.u32 %s162, 1
        %s315 = scalar_lea.sflag [#allocation4], %s314
        %s316 = sand.u32 %s162, 1
        %s317 = smul.addr %s316, 16
        %s318 = scalar_lea.vmem [#allocation8], %s317
        %p319 = pneg %p203
        %p320 = pneg %p200
        %s321 = sand.u32 %s190, 1
        %s322 = scalar_lea.sflag [#allocation10], %s321
        %s323 = sand.u32 %s190, 1
        %s324 = smul.addr %s323, 16
        %s325 = scalar_lea.vmem [#allocation9], %s324
        %v327 = vld [vmem:[%s284] sm:$0xf]
        %v328 = vld [vmem:[#allocation5] sm:$0xf]
        %v329 = vld [vmem:[%s2] sm:$0x1]
        %v331 = vlaneseq
        %v332 = vshrl.u32 %v331, 7
        %v333 = vsub.s32 0, %v332
        %v334 = vrot.slane %v329, %v333
        %vm336 = vcmask 130048
        %v338 = vsel %vm336, %v327, 0
        %v341 = vsel %vm336, %v328, 0
        %343 = vmatprep.subr.bf16.mxu0 0
        %344 = vmatpush1.bf16.xpose.msra.mxu0 %v341
        %345 = vmatprep.subr.bf16.mxu0 0
        %346 = vmatpush1.bf16.xpose.msra.mxu0 0
        %347 = vmatprep.subr.bf16.mxu0 0
        %348 = vmatpush1.bf16.xpose.msra.mxu0 0
        %349 = vmatprep.subr.bf16.mxu0 0
        %350 = vmatpush1.bf16.xpose.msra.mxu0 0
        %351 = vmatprep.subr.bf16.mxu0 0
        %352 = vmatpush1.bf16.xpose.msra.mxu0 0
        %353 = vmatprep.subr.bf16.mxu0 0
        %354 = vmatpush1.bf16.xpose.msra.mxu0 0
        %355 = vmatprep.subr.bf16.mxu0 0
        %356 = vmatpush1.bf16.xpose.msra.mxu0 0
        %357 = vmatprep.subr.bf16.mxu0 0
        %358 = vmatpush1.bf16.xpose.msra.mxu0 0
        %359 = vmatprep.subr.bf16.mxu0 0
        %360 = vmatpush1.bf16.xpose.msra.mxu0 0
        %361 = vmatprep.subr.bf16.mxu0 0
        %362 = vmatpush1.bf16.xpose.msra.mxu0 0
        %363 = vmatprep.subr.bf16.mxu0 0
        %364 = vmatpush1.bf16.xpose.msra.mxu0 0
        %365 = vmatprep.subr.bf16.mxu0 0
        %366 = vmatpush1.bf16.xpose.msra.mxu0 0
        %367 = vmatprep.subr.bf16.mxu0 0
        %368 = vmatpush1.bf16.xpose.msra.mxu0 0
        %369 = vmatprep.subr.bf16.mxu0 0
        %370 = vmatpush1.bf16.xpose.msra.mxu0 0
        %371 = vmatprep.subr.bf16.mxu0 0
        %372 = vmatpush1.bf16.xpose.msra.mxu0 0
        %373 = vmatprep.subr.bf16.mxu0 0
        %374 = vmatpush1.bf16.xpose.msra.mxu0 0
        %375 = vmatprep.mubr.bf16.mxu0 0
        %376 = vmatmul.mubr.bf16.gmra.mrb[0].mxu0 %v338
        %v377 = vpop.f32.mrb[0].mxu0
        %v378 = vadd.f32 %v334, %v377
        %v379 = vpop.f32.mrb[0].mxu0
        %v380 = vpop.f32.mrb[0].mxu0
        %v381 = vpop.f32.mrb[0].mxu0
        %382 = vdwg.mxu0
        %v383 = vld [vmem:[#allocation7] sm:$0xf]
        %v384 = vld [vmem:[%s4] sm:$0x1]
        %v386 = vlaneseq
        %v387 = vshrl.u32 %v386, 7
        %v388 = vsub.s32 0, %v387
        %v389 = vrot.slane %v384, %v388
        %v392 = vsel %vm336, %v383, 0
        %394 = vmatprep.subr.bf16.mxu0 0
        %395 = vmatpush1.bf16.xpose.msra.mxu0 %v392
        %396 = vmatprep.subr.bf16.mxu0 0
        %397 = vmatpush1.bf16.xpose.msra.mxu0 0
        %398 = vmatprep.subr.bf16.mxu0 0
        %399 = vmatpush1.bf16.xpose.msra.mxu0 0
        %400 = vmatprep.subr.bf16.mxu0 0
        %401 = vmatpush1.bf16.xpose.msra.mxu0 0
        %402 = vmatprep.subr.bf16.mxu0 0
        %403 = vmatpush1.bf16.xpose.msra.mxu0 0
        %404 = vmatprep.subr.bf16.mxu0 0
        %405 = vmatpush1.bf16.xpose.msra.mxu0 0
        %406 = vmatprep.subr.bf16.mxu0 0
        %407 = vmatpush1.bf16.xpose.msra.mxu0 0
        %408 = vmatprep.subr.bf16.mxu0 0
        %409 = vmatpush1.bf16.xpose.msra.mxu0 0
        %410 = vmatprep.subr.bf16.mxu0 0
        %411 = vmatpush1.bf16.xpose.msra.mxu0 0
        %412 = vmatprep.subr.bf16.mxu0 0
        %413 = vmatpush1.bf16.xpose.msra.mxu0 0
        %414 = vmatprep.subr.bf16.mxu0 0
        %415 = vmatpush1.bf16.xpose.msra.mxu0 0
        %416 = vmatprep.subr.bf16.mxu0 0
        %417 = vmatpush1.bf16.xpose.msra.mxu0 0
        %418 = vmatprep.subr.bf16.mxu0 0
        %419 = vmatpush1.bf16.xpose.msra.mxu0 0
        %420 = vmatprep.subr.bf16.mxu0 0
        %421 = vmatpush1.bf16.xpose.msra.mxu0 0
        %422 = vmatprep.subr.bf16.mxu0 0
        %423 = vmatpush1.bf16.xpose.msra.mxu0 0
        %424 = vmatprep.subr.bf16.mxu0 0
        %425 = vmatpush1.bf16.xpose.msra.mxu0 0
        %426 = vmatprep.mubr.bf16.mxu0 0
        %427 = vmatmul.mubr.bf16.gmra.mrb[0].mxu0 %v338
        %v428 = vpop.f32.mrb[0].mxu0
        %v429 = vadd.f32 %v389, %v428
        %v430 = vpop.f32.mrb[0].mxu0
        %v431 = vpop.f32.mrb[0].mxu0
        %v432 = vpop.f32.mrb[0].mxu0
        %433 = vdwg.mxu0
        %v434 = vpack.c.bf16 %v378, %v378
        %vm435 = vcmask 60416
        %436 = vst.msk [vmem:[%s318] sm:$0xf] %vm435, %v434
        %v437 = vpack.c.bf16 %v429, %v429
        %438 = vst.msk [vmem:[%s325] sm:$0xf] %vm435, %v437
        %s439 = scalar_lea.vmem [#allocation5], 4
        %v440 = vld [vmem:[%s439] sm:$0xf]
        %s441 = scalar_lea.vmem %s2, 1
        %v442 = vld [vmem:[%s441] sm:$0x1]
        %v444 = vlaneseq
        %v445 = vshrl.u32 %v444, 7
        %v446 = vsub.s32 0, %v445
        %v447 = vrot.slane %v442, %v446
        %v450 = vsel %vm336, %v440, 0
        %452 = vmatprep.subr.bf16.mxu0 0
        %453 = vmatpush1.bf16.xpose.msra.mxu0 %v450
        %454 = vmatprep.subr.bf16.mxu0 0
        %455 = vmatpush1.bf16.xpose.msra.mxu0 0
        %456 = vmatprep.subr.bf16.mxu0 0
        %457 = vmatpush1.bf16.xpose.msra.mxu0 0
        %458 = vmatprep.subr.bf16.mxu0 0
        %459 = vmatpush1.bf16.xpose.msra.mxu0 0
        %460 = vmatprep.subr.bf16.mxu0 0
        %461 = vmatpush1.bf16.xpose.msra.mxu0 0
        %462 = vmatprep.subr.bf16.mxu0 0
        %463 = vmatpush1.bf16.xpose.msra.mxu0 0
        %464 = vmatprep.subr.bf16.mxu0 0
        %465 = vmatpush1.bf16.xpose.msra.mxu0 0
        %466 = vmatprep.subr.bf16.mxu0 0
        %467 = vmatpush1.bf16.xpose.msra.mxu0 0
        %468 = vmatprep.subr.bf16.mxu0 0
        %469 = vmatpush1.bf16.xpose.msra.mxu0 0
        %470 = vmatprep.subr.bf16.mxu0 0
        %471 = vmatpush1.bf16.xpose.msra.mxu0 0
        %472 = vmatprep.subr.bf16.mxu0 0
        %473 = vmatpush1.bf16.xpose.msra.mxu0 0
        %474 = vmatprep.subr.bf16.mxu0 0
        %475 = vmatpush1.bf16.xpose.msra.mxu0 0
        %476 = vmatprep.subr.bf16.mxu0 0
        %477 = vmatpush1.bf16.xpose.msra.mxu0 0
        %478 = vmatprep.subr.bf16.mxu0 0
        %479 = vmatpush1.bf16.xpose.msra.mxu0 0
        %480 = vmatprep.subr.bf16.mxu0 0
        %481 = vmatpush1.bf16.xpose.msra.mxu0 0
        %482 = vmatprep.subr.bf16.mxu0 0
        %483 = vmatpush1.bf16.xpose.msra.mxu0 0
        %484 = vmatprep.mubr.bf16.mxu0 0
        %485 = vmatmul.mubr.bf16.gmra.mrb[0].mxu0 %v338
        %v486 = vpop.f32.mrb[0].mxu0
        %v487 = vadd.f32 %v447, %v486
        %v488 = vpop.f32.mrb[0].mxu0
        %v489 = vpop.f32.mrb[0].mxu0
        %v490 = vpop.f32.mrb[0].mxu0
        %491 = vdwg.mxu0
        %s492 = scalar_lea.vmem [#allocation7], 4
        %v493 = vld [vmem:[%s492] sm:$0xf]
        %s494 = scalar_lea.vmem %s4, 1
        %v495 = vld [vmem:[%s494] sm:$0x1]
        %v497 = vlaneseq
        %v498 = vshrl.u32 %v497, 7
        %v499 = vsub.s32 0, %v498
        %v500 = vrot.slane %v495, %v499
        %v503 = vsel %vm336, %v493, 0
        %505 = vmatprep.subr.bf16.mxu0 0
        %506 = vmatpush1.bf16.xpose.msra.mxu0 %v503
        %507 = vmatprep.subr.bf16.mxu0 0
        %508 = vmatpush1.bf16.xpose.msra.mxu0 0
        %509 = vmatprep.subr.bf16.mxu0 0
        %510 = vmatpush1.bf16.xpose.msra.mxu0 0
        %511 = vmatprep.subr.bf16.mxu0 0
        %512 = vmatpush1.bf16.xpose.msra.mxu0 0
        %513 = vmatprep.subr.bf16.mxu0 0
        %514 = vmatpush1.bf16.xpose.msra.mxu0 0
        %515 = vmatprep.subr.bf16.mxu0 0
        %516 = vmatpush1.bf16.xpose.msra.mxu0 0
        %517 = vmatprep.subr.bf16.mxu0 0
        %518 = vmatpush1.bf16.xpose.msra.mxu0 0
        %519 = vmatprep.subr.bf16.mxu0 0
        %520 = vmatpush1.bf16.xpose.msra.mxu0 0
        %521 = vmatprep.subr.bf16.mxu0 0
        %522 = vmatpush1.bf16.xpose.msra.mxu0 0
        %523 = vmatprep.subr.bf16.mxu0 0
        %524 = vmatpush1.bf16.xpose.msra.mxu0 0
        %525 = vmatprep.subr.bf16.mxu0 0
        %526 = vmatpush1.bf16.xpose.msra.mxu0 0
        %527 = vmatprep.subr.bf16.mxu0 0
        %528 = vmatpush1.bf16.xpose.msra.mxu0 0
        %529 = vmatprep.subr.bf16.mxu0 0
        %530 = vmatpush1.bf16.xpose.msra.mxu0 0
        %531 = vmatprep.subr.bf16.mxu0 0
        %532 = vmatpush1.bf16.xpose.msra.mxu0 0
        %533 = vmatprep.subr.bf16.mxu0 0
        %534 = vmatpush1.bf16.xpose.msra.mxu0 0
        %535 = vmatprep.subr.bf16.mxu0 0
        %536 = vmatpush1.bf16.xpose.msra.mxu0 0
        %537 = vmatprep.mubr.bf16.mxu0 0
        %538 = vmatmul.mubr.bf16.gmra.mrb[0].mxu0 %v338
        %v539 = vpop.f32.mrb[0].mxu0
        %v540 = vadd.f32 %v500, %v539
        %v541 = vpop.f32.mrb[0].mxu0
        %v542 = vpop.f32.mrb[0].mxu0
        %v543 = vpop.f32.mrb[0].mxu0
        %544 = vdwg.mxu0
        %v545 = vpack.c.bf16 %v487, %v487
        %s546 = scalar_lea.vmem %s318, 4 [#allocation8]
        %547 = vst.msk [vmem:[%s546] sm:$0xf] %vm435, %v545
        %v548 = vpack.c.bf16 %v540, %v540
        %s549 = scalar_lea.vmem %s325, 4 [#allocation9]
        %550 = vst.msk [vmem:[%s549] sm:$0xf] %vm435, %v548
        %s551 = scalar_lea.vmem [#allocation5], 8
        %v552 = vld [vmem:[%s551] sm:$0xf]
        %s553 = scalar_lea.vmem %s2, 2
        %v554 = vld [vmem:[%s553] sm:$0x1]
        %v556 = vlaneseq
        %v557 = vshrl.u32 %v556, 7
        %v558 = vsub.s32 0, %v557
        %v559 = vrot.slane %v554, %v558
        %v562 = vsel %vm336, %v552, 0
        %564 = vmatprep.subr.bf16.mxu0 0
        %565 = vmatpush1.bf16.xpose.msra.mxu0 %v562
        %566 = vmatprep.subr.bf16.mxu0 0
        %567 = vmatpush1.bf16.xpose.msra.mxu0 0
        %568 = vmatprep.subr.bf16.mxu0 0
        %569 = vmatpush1.bf16.xpose.msra.mxu0 0
        %570 = vmatprep.subr.bf16.mxu0 0
        %571 = vmatpush1.bf16.xpose.msra.mxu0 0
        %572 = vmatprep.subr.bf16.mxu0 0
        %573 = vmatpush1.bf16.xpose.msra.mxu0 0
        %574 = vmatprep.subr.bf16.mxu0 0
        %575 = vmatpush1.bf16.xpose.msra.mxu0 0
        %576 = vmatprep.subr.bf16.mxu0 0
        %577 = vmatpush1.bf16.xpose.msra.mxu0 0
        %578 = vmatprep.subr.bf16.mxu0 0
        %579 = vmatpush1.bf16.xpose.msra.mxu0 0
        %580 = vmatprep.subr.bf16.mxu0 0
        %581 = vmatpush1.bf16.xpose.msra.mxu0 0
        %582 = vmatprep.subr.bf16.mxu0 0
        %583 = vmatpush1.bf16.xpose.msra.mxu0 0
        %584 = vmatprep.subr.bf16.mxu0 0
        %585 = vmatpush1.bf16.xpose.msra.mxu0 0
        %586 = vmatprep.subr.bf16.mxu0 0
        %587 = vmatpush1.bf16.xpose.msra.mxu0 0
        %588 = vmatprep.subr.bf16.mxu0 0
        %589 = vmatpush1.bf16.xpose.msra.mxu0 0
        %590 = vmatprep.subr.bf16.mxu0 0
        %591 = vmatpush1.bf16.xpose.msra.mxu0 0
        %592 = vmatprep.subr.bf16.mxu0 0
        %593 = vmatpush1.bf16.xpose.msra.mxu0 0
        %594 = vmatprep.subr.bf16.mxu0 0
        %595 = vmatpush1.bf16.xpose.msra.mxu0 0
        %596 = vmatprep.mubr.bf16.mxu0 0
        %597 = vmatmul.mubr.bf16.gmra.mrb[0].mxu0 %v338
        %v598 = vpop.f32.mrb[0].mxu0
        %v599 = vadd.f32 %v559, %v598
        %v600 = vpop.f32.mrb[0].mxu0
        %v601 = vpop.f32.mrb[0].mxu0
        %v602 = vpop.f32.mrb[0].mxu0
        %603 = vdwg.mxu0
        %s604 = scalar_lea.vmem [#allocation7], 8
        %v605 = vld [vmem:[%s604] sm:$0xf]
        %s606 = scalar_lea.vmem %s4, 2
        %v607 = vld [vmem:[%s606] sm:$0x1]
        %v609 = vlaneseq
        %v610 = vshrl.u32 %v609, 7
        %v611 = vsub.s32 0, %v610
        %v612 = vrot.slane %v607, %v611
        %v615 = vsel %vm336, %v605, 0
        %617 = vmatprep.subr.bf16.mxu0 0
        %618 = vmatpush1.bf16.xpose.msra.mxu0 %v615
        %619 = vmatprep.subr.bf16.mxu0 0
        %620 = vmatpush1.bf16.xpose.msra.mxu0 0
        %621 = vmatprep.subr.bf16.mxu0 0
        %622 = vmatpush1.bf16.xpose.msra.mxu0 0
        %623 = vmatprep.subr.bf16.mxu0 0
        %624 = vmatpush1.bf16.xpose.msra.mxu0 0
        %625 = vmatprep.subr.bf16.mxu0 0
        %626 = vmatpush1.bf16.xpose.msra.mxu0 0
        %627 = vmatprep.subr.bf16.mxu0 0
        %628 = vmatpush1.bf16.xpose.msra.mxu0 0
        %629 = vmatprep.subr.bf16.mxu0 0
        %630 = vmatpush1.bf16.xpose.msra.mxu0 0
        %631 = vmatprep.subr.bf16.mxu0 0
        %632 = vmatpush1.bf16.xpose.msra.mxu0 0
        %633 = vmatprep.subr.bf16.mxu0 0
        %634 = vmatpush1.bf16.xpose.msra.mxu0 0
        %635 = vmatprep.subr.bf16.mxu0 0
        %636 = vmatpush1.bf16.xpose.msra.mxu0 0
        %637 = vmatprep.subr.bf16.mxu0 0
        %638 = vmatpush1.bf16.xpose.msra.mxu0 0
        %639 = vmatprep.subr.bf16.mxu0 0
        %640 = vmatpush1.bf16.xpose.msra.mxu0 0
        %641 = vmatprep.subr.bf16.mxu0 0
        %642 = vmatpush1.bf16.xpose.msra.mxu0 0
        %643 = vmatprep.subr.bf16.mxu0 0
        %644 = vmatpush1.bf16.xpose.msra.mxu0 0
        %645 = vmatprep.subr.bf16.mxu0 0
        %646 = vmatpush1.bf16.xpose.msra.mxu0 0
        %647 = vmatprep.subr.bf16.mxu0 0
        %648 = vmatpush1.bf16.xpose.msra.mxu0 0
        %649 = vmatprep.mubr.bf16.mxu0 0
        %650 = vmatmul.mubr.bf16.gmra.mrb[0].mxu0 %v338
        %v651 = vpop.f32.mrb[0].mxu0
        %v652 = vadd.f32 %v612, %v651
        %v653 = vpop.f32.mrb[0].mxu0
        %v654 = vpop.f32.mrb[0].mxu0
        %v655 = vpop.f32.mrb[0].mxu0
        %656 = vdwg.mxu0
        %v657 = vpack.c.bf16 %v599, %v599
        %s658 = scalar_lea.vmem %s318, 8 [#allocation8]
        %659 = vst.msk [vmem:[%s658] sm:$0xf] %vm435, %v657
        %v660 = vpack.c.bf16 %v652, %v652
        %s661 = scalar_lea.vmem %s325, 8 [#allocation9]
        %662 = vst.msk [vmem:[%s661] sm:$0xf] %vm435, %v660
        %s663 = scalar_lea.vmem [#allocation5], 12
        %v664 = vld [vmem:[%s663] sm:$0xf]
        %s665 = scalar_lea.vmem %s2, 3
        %v666 = vld [vmem:[%s665] sm:$0x1]
        %v668 = vlaneseq
        %v669 = vshrl.u32 %v668, 7
        %v670 = vsub.s32 0, %v669
        %v671 = vrot.slane %v666, %v670
        %v674 = vsel %vm336, %v664, 0
        %676 = vmatprep.subr.bf16.mxu0 0
        %677 = vmatpush1.bf16.xpose.msra.mxu0 %v674
        %678 = vmatprep.subr.bf16.mxu0 0
        %679 = vmatpush1.bf16.xpose.msra.mxu0 0
        %680 = vmatprep.subr.bf16.mxu0 0
        %681 = vmatpush1.bf16.xpose.msra.mxu0 0
        %682 = vmatprep.subr.bf16.mxu0 0
        %683 = vmatpush1.bf16.xpose.msra.mxu0 0
        %684 = vmatprep.subr.bf16.mxu0 0
        %685 = vmatpush1.bf16.xpose.msra.mxu0 0
        %686 = vmatprep.subr.bf16.mxu0 0
        %687 = vmatpush1.bf16.xpose.msra.mxu0 0
        %688 = vmatprep.subr.bf16.mxu0 0
        %689 = vmatpush1.bf16.xpose.msra.mxu0 0
        %690 = vmatprep.subr.bf16.mxu0 0
        %691 = vmatpush1.bf16.xpose.msra.mxu0 0
        %692 = vmatprep.subr.bf16.mxu0 0
        %693 = vmatpush1.bf16.xpose.msra.mxu0 0
        %694 = vmatprep.subr.bf16.mxu0 0
        %695 = vmatpush1.bf16.xpose.msra.mxu0 0
        %696 = vmatprep.subr.bf16.mxu0 0
        %697 = vmatpush1.bf16.xpose.msra.mxu0 0
        %698 = vmatprep.subr.bf16.mxu0 0
        %699 = vmatpush1.bf16.xpose.msra.mxu0 0
        %700 = vmatprep.subr.bf16.mxu0 0
        %701 = vmatpush1.bf16.xpose.msra.mxu0 0
        %702 = vmatprep.subr.bf16.mxu0 0
        %703 = vmatpush1.bf16.xpose.msra.mxu0 0
        %704 = vmatprep.subr.bf16.mxu0 0
        %705 = vmatpush1.bf16.xpose.msra.mxu0 0
        %706 = vmatprep.subr.bf16.mxu0 0
        %707 = vmatpush1.bf16.xpose.msra.mxu0 0
        %708 = vmatprep.mubr.bf16.mxu0 0
        %709 = vmatmul.mubr.bf16.gmra.mrb[0].mxu0 %v338
        %v710 = vpop.f32.mrb[0].mxu0
        %v711 = vadd.f32 %v671, %v710
        %v712 = vpop.f32.mrb[0].mxu0
        %v713 = vpop.f32.mrb[0].mxu0
        %v714 = vpop.f32.mrb[0].mxu0
        %715 = vdwg.mxu0
        %s716 = scalar_lea.vmem [#allocation7], 12
        %v717 = vld [vmem:[%s716] sm:$0xf]
        %s718 = scalar_lea.vmem %s4, 3
        %v719 = vld [vmem:[%s718] sm:$0x1]
        %v721 = vlaneseq
        %v722 = vshrl.u32 %v721, 7
        %v723 = vsub.s32 0, %v722
        %v724 = vrot.slane %v719, %v723
        %v727 = vsel %vm336, %v717, 0
        %729 = vmatprep.subr.bf16.mxu0 0
        %730 = vmatpush1.bf16.xpose.msra.mxu0 %v727
        %731 = vmatprep.subr.bf16.mxu0 0
        %732 = vmatpush1.bf16.xpose.msra.mxu0 0
        %733 = vmatprep.subr.bf16.mxu0 0
        %734 = vmatpush1.bf16.xpose.msra.mxu0 0
        %735 = vmatprep.subr.bf16.mxu0 0
        %736 = vmatpush1.bf16.xpose.msra.mxu0 0
        %737 = vmatprep.subr.bf16.mxu0 0
        %738 = vmatpush1.bf16.xpose.msra.mxu0 0
        %739 = vmatprep.subr.bf16.mxu0 0
        %740 = vmatpush1.bf16.xpose.msra.mxu0 0
        %741 = vmatprep.subr.bf16.mxu0 0
        %742 = vmatpush1.bf16.xpose.msra.mxu0 0
        %743 = vmatprep.subr.bf16.mxu0 0
        %744 = vmatpush1.bf16.xpose.msra.mxu0 0
        %745 = vmatprep.subr.bf16.mxu0 0
        %746 = vmatpush1.bf16.xpose.msra.mxu0 0
        %747 = vmatprep.subr.bf16.mxu0 0
        %748 = vmatpush1.bf16.xpose.msra.mxu0 0
        %749 = vmatprep.subr.bf16.mxu0 0
        %750 = vmatpush1.bf16.xpose.msra.mxu0 0
        %751 = vmatprep.subr.bf16.mxu0 0
        %752 = vmatpush1.bf16.xpose.msra.mxu0 0
        %753 = vmatprep.subr.bf16.mxu0 0
        %754 = vmatpush1.bf16.xpose.msra.mxu0 0
        %755 = vmatprep.subr.bf16.mxu0 0
        %756 = vmatpush1.bf16.xpose.msra.mxu0 0
        %757 = vmatprep.subr.bf16.mxu0 0
        %758 = vmatpush1.bf16.xpose.msra.mxu0 0
        %759 = vmatprep.subr.bf16.mxu0 0
        %760 = vmatpush1.bf16.xpose.msra.mxu0 0
        %761 = vmatprep.mubr.bf16.mxu0 0
        %762 = vmatmul.mubr.bf16.gmra.mrb[0].mxu0 %v338
        %v763 = vpop.f32.mrb[0].mxu0
        %v764 = vadd.f32 %v724, %v763
        %v765 = vpop.f32.mrb[0].mxu0
        %v766 = vpop.f32.mrb[0].mxu0
        %v767 = vpop.f32.mrb[0].mxu0
        %768 = vdwg.mxu0
        %v769 = vpack.c.bf16 %v711, %v711
        %s770 = scalar_lea.vmem %s318, 12 [#allocation8]
        %771 = vst.msk [vmem:[%s770] sm:$0xf] %vm435, %v769
        %v772 = vpack.c.bf16 %v764, %v764
        %s773 = scalar_lea.vmem %s325, 12 [#allocation9]
        %774 = vst.msk [vmem:[%s773] sm:$0xf] %vm435, %v772
        %s775 = sand.u32 %s162, 1
        %s776 = scalar_lea.sflag [#allocation4], %s775
        %s777 = sand.u32 %s162, 1
        %s778 = smul.addr %s777, 16
        %s779 = scalar_lea.vmem [#allocation8], %s778
        %s780 = sand.u32 %s190, 1
        %s781 = scalar_lea.sflag [#allocation10], %s780
        %s782 = sand.u32 %s190, 1
        %s783 = smul.addr %s782, 16
        %s784 = scalar_lea.vmem [#allocation9], %s783
        // Predicated region
        $region53: #{tpu_custom_call.1} parent=39 // pred_check
          %p785 = pneg %p172
        $region54: #{tpu_custom_call.1} parent=39 // pred_check_branch
          %787 = sbr.rel (%p785) target = $region56
        $region55: #{tpu_custom_call.1} parent=39 // pred_region
          %s789 = ssub.s32 256, 256
          %790 = vsyncadd %s776, %s789
          %s791 = smul.addr %s32, 4
          %s792 = sadd.s32 %s33, %s791
          %s793 = smul.addr %s792, 64
          %s794 = scalar_lea.hbm %s5, %s793
          %s795 = sshll.u32 %s779, 4
          %s796 = int_to_ptr.vmem [resolvable:$true] %s795
          %801 = dma.vmem_to_hbm [thread:$0]  %s796, 256, %s794, %s776, 64, 64, 4
        $region56: #{tpu_custom_call.1} parent=39 // pred_fallthru
          _
        // Predicated region
        $region57: #{tpu_custom_call.1} parent=39 // pred_check
          %p802 = pneg %p200
        $region58: #{tpu_custom_call.1} parent=39 // pred_check_branch
          %804 = sbr.rel (%p802) target = $region60
        $region59: #{tpu_custom_call.1} parent=39 // pred_region
          %s806 = ssub.s32 256, 256
          %807 = vsyncadd %s781, %s806
          %s808 = smul.addr %s32, 4
          %s809 = sadd.s32 %s33, %s808
          %s810 = smul.addr %s809, 64
          %s811 = scalar_lea.hbm %s6, %s810
          %s812 = sshll.u32 %s784, 4
          %s813 = int_to_ptr.vmem [resolvable:$true] %s812
          %818 = dma.vmem_to_hbm [thread:$0]  %s813, 256, %s811, %s781, 64, 64, 4
        $region60: #{tpu_custom_call.1} parent=39 // pred_fallthru
          _
      $region40: #{tpu_custom_call.1} parent=5 // pred_fallthru
        _
      %p819 = scmp.le.s32.totalorder 2, %s23
      // Predicated region
      $region61: #{tpu_custom_call.1} parent=5 // pred_check
        %p820 = pneg %p819
      $region62: #{tpu_custom_call.1} parent=5 // pred_check_branch
        %822 = sbr.rel (%p820) target = $region64
      $region63: #{tpu_custom_call.1} parent=5 // pred_region
        %s823 = ssub.s32 %s23, 2
        // Predicated region
        $region65: #{tpu_custom_call.1} parent=63 // pred_check
          %p824 = pneg %p178
        $region66: #{tpu_custom_call.1} parent=63 // pred_check_branch
          %826 = sbr.rel (%p824) target = $region68
        $region67: #{tpu_custom_call.1} parent=63 // pred_region
          %s827 = sand.u32 %s163, 1
          %s828 = scalar_lea.sflag [#allocation4], %s827
          %s829 = sand.u32 %s163, 1
          %s830 = smul.addr %s829, 16
          %s831 = scalar_lea.vmem [#allocation8], %s830
          %832 = dma.done %s828, 256
        $region68: #{tpu_custom_call.1} parent=63 // pred_fallthru
          _
        // Predicated region
        $region69: #{tpu_custom_call.1} parent=63 // pred_check
          %p833 = pneg %p206
        $region70: #{tpu_custom_call.1} parent=63 // pred_check_branch
          %835 = sbr.rel (%p833) target = $region72
        $region71: #{tpu_custom_call.1} parent=63 // pred_region
          %s836 = sand.u32 %s191, 1
          %s837 = scalar_lea.sflag [#allocation10], %s836
          %s838 = sand.u32 %s191, 1
          %s839 = smul.addr %s838, 16
          %s840 = scalar_lea.vmem [#allocation9], %s839
          %841 = dma.done %s837, 256
        $region72: #{tpu_custom_call.1} parent=63 // pred_fallthru
          _
      $region64: #{tpu_custom_call.1} parent=5 // pred_fallthru
        _
    $region6: #{tpu_custom_call.1} parent=1 // loop_footer
      %s27 = sadd.s32 1, %s23
    $region7: #{tpu_custom_call.1} parent=1 // loop_footer_branch
      %22 = sbr.rel target = $region3
    $region8: #{tpu_custom_call.1} parent=1 // loop_exit
      _
    %842 = vsyncpa [#allocation3], 1
    %s843 = scalar_lea.sflag [#allocation3], 1
    %844 = vsyncpa %s843, 1
    %845 = vsyncpa [#allocation6], 1
    %846 = vsyncpa [#allocation4], 1
    %s847 = scalar_lea.sflag [#allocation4], 1
    %848 = vsyncpa %s847, 1
    %849 = vsyncpa [#allocation10], 1
    %s850 = scalar_lea.sflag [#allocation10], 1
    %851 = vsyncpa %s850, 1

// kernel: tpu_custom_call.1
$region0: #{tpu_custom_call.1}
  #allocation0 [shape = 'u32[]', space=smem, size = 0x4, offset = 0x4, fixed_abs, tag = 'smem constant byte address 0x4 - core index']
  #allocation1 [shape = 'u32[144,128]{1,0:T(1,128)}', space=vmem, size = 0x12000, scoped, tag = 'internal scratch']
  %s0 = inlined_call_operand.hbm [shape: bf16[2,8,16], index: 0, kind: input, shape index: {}]
  %s1 = inlined_call_operand.hbm [shape: bf16[4,8,16], index: 1, kind: input, shape index: {}]
  %s2 = inlined_call_operand.vmem [shape: f32[4,1,8], index: 2, kind: input, shape index: {}]
  %s3 = inlined_call_operand.hbm [shape: bf16[4,8,16], index: 3, kind: input, shape index: {}]
  %s4 = inlined_call_operand.vmem [shape: f32[4,1,8], index: 4, kind: input, shape index: {}]
  %s5 = inlined_call_operand.hbm [shape: bf16[2,4,8,8], index: 5, kind: output, shape index: {0}]
  %s6 = inlined_call_operand.hbm [shape: bf16[2,4,8,8], index: 6, kind: output, shape index: {1}]
  %7 = xla_tuple %s5, %s6
  %s8 = sld [smem:[#allocation0]]
  $region73: #{tpu_custom_call.1} parent=0
    _
  %s10 = ssub.s32 1, %s8
  %s11 = scalar_select 0, %s10, %s8
  $region1: #{tpu_custom_call.1} parent=0
    #allocation2 [shape = 'u8[4096]{0}', space=vmem, size = 0x1000, scoped, tag = 'input window, operand 0']
    #allocation3 [shape = 's32[2]{0}', space=sflag, size = 0x8, scoped, tag = 'scoped memory for tpu_custom_call.1']
    #allocation4 [shape = 's32[2]{0}', space=sflag, size = 0x8, scoped, tag = 'scoped memory for tpu_custom_call.1']
    #allocation5 [shape = 'u8[8192]{0}', space=vmem, size = 0x2000, scoped, tag = 'input window, operand 1, single buffered']
    #allocation6 [shape = 's32[1]{0}', space=sflag, size = 0x4, scoped, tag = 'scoped memory for tpu_custom_call.1']
    #allocation7 [shape = 'u8[8192]{0}', space=vmem, size = 0x2000, scoped, tag = 'input window, operand 3, single buffered']
    #allocation8 [shape = 'u8[16384]{0}', space=vmem, size = 0x4000, scoped, tag = 'output window, operand 0']
    #allocation9 [shape = 'u8[16384]{0}', space=vmem, size = 0x4000, scoped, tag = 'output window, operand 1']
    #allocation10 [shape = 's32[2]{0}', space=sflag, size = 0x8, scoped, tag = 'scoped memory for tpu_custom_call.1']
    %12 = vsyncpa [#allocation3], 0
    %s13 = scalar_lea.sflag [#allocation3], 1
    %14 = vsyncpa %s13, 0
    %15 = vsyncpa [#allocation6], 0
    %16 = vsyncpa [#allocation4], 0
    %s17 = scalar_lea.sflag [#allocation4], 1
    %18 = vsyncpa %s17, 0
    %19 = vsyncpa [#allocation10], 0
    %s20 = scalar_lea.sflag [#allocation10], 1
    %21 = vsyncpa %s20, 0
    loop: start=0, step=1, limit=4
    $region2: #{tpu_custom_call.1} parent=1 // loop_pre_header
      _
    $region3: #{tpu_custom_call.1} parent=1 // loop_header
      %s23 = sphi 0, %s27
      %p24 = scmp.ge.s32.totalorder %s23, 4
      %s30 = sphi 0, %s42
      %s31 = sphi 0, %s38
      %s32 = sphi 0, %s30
      %s33 = sphi 0, %s31
      %s34 = sphi 0, %s32
      %s35 = sphi 0, %s33
      %s47 = sphi 0, %s49
      %s50 = sphi 0, %s47
      %s51 = sphi 0, %s50
      %s67 = sphi 0, %s51
      %s71 = sphi 0, %s71
      %s73 = sphi 0, %s71
      %s74 = sphi 0, %s73
      %s88 = sphi 0, %s74
      %s92 = sphi 0, %s92
      %s94 = sphi 0, %s92
      %s95 = sphi 0, %s94
      %s109 = sphi 0, %s95
      %s113 = sphi 0, %s113
      %s115 = sphi 0, %s113
      %s116 = sphi 0, %s115
      %s130 = sphi 0, %s116
      %s134 = sphi 0, %s134
      %s136 = sphi 0, %s134
      %s137 = sphi 0, %s136
      %s151 = sphi 0, %s137
      %s159 = sphi 0, %s161
      %s162 = sphi 0, %s159
      %s163 = sphi 0, %s162
      %s179 = sphi 0, %s163
      %s187 = sphi 0, %s189
      %s190 = sphi 0, %s187
      %s191 = sphi 0, %s190
      %s207 = sphi 0, %s191
    $region4: #{tpu_custom_call.1} parent=1 // loop_header_branch
      %26 = sbr.rel (%p24) target = $region8
    $region5: #{tpu_custom_call.1} parent=1 // loop_body
      %s28 = ssub.s32 %s23, 1
      %s29 = ssub.s32 %s23, 2
      %s36 = sadd.s32 1, %s31
      %p37 = scmp.ge.s32.totalorder %s36, 1
      %s38 = scalar_select %p37, 0, %s36
      %s39 = sadd.s32 1, %s30
      %s40 = scalar_select %p37, %s39, %s30
      %p41 = scmp.ge.s32.totalorder %s40, 2
      %s42 = scalar_select %p41, 0, %s40
      %s43 = ssub.s32 %s30, %s42
      %s44 = ssub.s32 %s31, %s38
      %s45 = sor.u32 %s43, %s44
      %p46 = scmp.eq.s32.totalorder %s45, 0
      %s48 = sadd.s32 %s47, 1
      %s49 = scalar_select %p46, %s47, %s48
      %p52 = pneg %p46
      %p53 = scmp.eq.s32.totalorder %s23, 1
      %p54 = por %p52, %p53
      %p55 = scmp.ne.s32.totalorder %s47, %s50
      %p56 = scmp.eq.s32.totalorder %s23, 0
      %p57 = por %p55, %p56
      %p58 = scmp.ne.s32.totalorder %s47, %s50
      %p59 = scmp.eq.s32.totalorder %s28, 1
      %p60 = por %p58, %p59
      %p61 = scmp.ne.s32.totalorder %s50, %s51
      %p62 = scmp.eq.s32.totalorder %s28, 0
      %p63 = por %p61, %p62
      %p64 = scmp.ne.s32.totalorder %s50, %s51
      %p65 = scmp.eq.s32.totalorder %s29, 1
      %p66 = por %p64, %p65
      %p68 = scmp.ne.s32.totalorder %s51, %s67
      %p69 = scmp.eq.s32.totalorder %s29, 0
      %p70 = por %p68, %p69
      %s72 = sadd.s32 %s71, 1
      %p75 = scmp.eq.s32.totalorder %s23, 1
      %p76 = scmp.ne.s32.totalorder %s71, %s73
      %p77 = scmp.eq.s32.totalorder %s23, 0
      %p78 = por %p76, %p77
      %p79 = scmp.ne.s32.totalorder %s71, %s73
      %p80 = scmp.eq.s32.totalorder %s28, 1
      %p81 = por %p79, %p80
      %p82 = scmp.ne.s32.totalorder %s73, %s74
      %p83 = scmp.eq.s32.totalorder %s28, 0
      %p84 = por %p82, %p83
      %p85 = scmp.ne.s32.totalorder %s73, %s74
      %p86 = scmp.eq.s32.totalorder %s29, 1
      %p87 = por %p85, %p86
      %p89 = scmp.ne.s32.totalorder %s74, %s88
      %p90 = scmp.eq.s32.totalorder %s29, 0
      %p91 = por %p89, %p90
      %s93 = sadd.s32 %s92, 1
      %p96 = scmp.eq.s32.totalorder %s23, 1
      %p97 = scmp.ne.s32.totalorder %s92, %s94
      %p98 = scmp.eq.s32.totalorder %s23, 0
      %p99 = por %p97, %p98
      %p100 = scmp.ne.s32.totalorder %s92, %s94
      %p101 = scmp.eq.s32.totalorder %s28, 1
      %p102 = por %p100, %p101
      %p103 = scmp.ne.s32.totalorder %s94, %s95
      %p104 = scmp.eq.s32.totalorder %s28, 0
      %p105 = por %p103, %p104
      %p106 = scmp.ne.s32.totalorder %s94, %s95
      %p107 = scmp.eq.s32.totalorder %s29, 1
      %p108 = por %p106, %p107
      %p110 = scmp.ne.s32.totalorder %s95, %s109
      %p111 = scmp.eq.s32.totalorder %s29, 0
      %p112 = por %p110, %p111
      %s114 = sadd.s32 %s113, 1
      %p117 = scmp.eq.s32.totalorder %s23, 1
      %p118 = scmp.ne.s32.totalorder %s113, %s115
      %p119 = scmp.eq.s32.totalorder %s23, 0
      %p120 = por %p118, %p119
      %p121 = scmp.ne.s32.totalorder %s113, %s115
      %p122 = scmp.eq.s32.totalorder %s28, 1
      %p123 = por %p121, %p122
      %p124 = scmp.ne.s32.totalorder %s115, %s116
      %p125 = scmp.eq.s32.totalorder %s28, 0
      %p126 = por %p124, %p125
      %p127 = scmp.ne.s32.totalorder %s115, %s116
      %p128 = scmp.eq.s32.totalorder %s29, 1
      %p129 = por %p127, %p128
      %p131 = scmp.ne.s32.totalorder %s116, %s130
      %p132 = scmp.eq.s32.totalorder %s29, 0
      %p133 = por %p131, %p132
      %s135 = sadd.s32 %s134, 1
      %p138 = scmp.eq.s32.totalorder %s23, 1
      %p139 = scmp.ne.s32.totalorder %s134, %s136
      %p140 = scmp.eq.s32.totalorder %s23, 0
      %p141 = por %p139, %p140
      %p142 = scmp.ne.s32.totalorder %s134, %s136
      %p143 = scmp.eq.s32.totalorder %s28, 1
      %p144 = por %p142, %p143
      %p145 = scmp.ne.s32.totalorder %s136, %s137
      %p146 = scmp.eq.s32.totalorder %s28, 0
      %p147 = por %p145, %p146
      %p148 = scmp.ne.s32.totalorder %s136, %s137
      %p149 = scmp.eq.s32.totalorder %s29, 1
      %p150 = por %p148, %p149
      %p152 = scmp.ne.s32.totalorder %s137, %s151
      %p153 = scmp.eq.s32.totalorder %s29, 0
      %p154 = por %p152, %p153
      %s155 = ssub.s32 %s30, %s42
      %s156 = ssub.s32 %s31, %s38
      %s157 = sor.u32 %s155, %s156
      %p158 = scmp.eq.s32.totalorder %s157, 0
      %s160 = sadd.s32 %s159, 1
      %s161 = scalar_select %p158, %s159, %s160
      %p164 = pneg %p158
      %p165 = scmp.eq.s32.totalorder %s23, 1
      %p166 = por %p164, %p165
      %p167 = scmp.ne.s32.totalorder %s159, %s162
      %p168 = scmp.eq.s32.totalorder %s23, 0
      %p169 = por %p167, %p168
      %p170 = scmp.ne.s32.totalorder %s159, %s162
      %p171 = scmp.eq.s32.totalorder %s28, 1
      %p172 = por %p170, %p171
      %p173 = scmp.ne.s32.totalorder %s162, %s163
      %p174 = scmp.eq.s32.totalorder %s28, 0
      %p175 = por %p173, %p174
      %p176 = scmp.ne.s32.totalorder %s162, %s163
      %p177 = scmp.eq.s32.totalorder %s29, 1
      %p178 = por %p176, %p177
      %p180 = scmp.ne.s32.totalorder %s163, %s179
      %p181 = scmp.eq.s32.totalorder %s29, 0
      %p182 = por %p180, %p181
      %s183 = ssub.s32 %s30, %s42
      %s184 = ssub.s32 %s31, %s38
      %s185 = sor.u32 %s183, %s184
      %p186 = scmp.eq.s32.totalorder %s185, 0
      %s188 = sadd.s32 %s187, 1
      %s189 = scalar_select %p186, %s187, %s188
      %p192 = pneg %p186
      %p193 = scmp.eq.s32.totalorder %s23, 1
      %p194 = por %p192, %p193
      %p195 = scmp.ne.s32.totalorder %s187, %s190
      %p196 = scmp.eq.s32.totalorder %s23, 0
      %p197 = por %p195, %p196
      %p198 = scmp.ne.s32.totalorder %s187, %s190
      %p199 = scmp.eq.s32.totalorder %s28, 1
      %p200 = por %p198, %p199
      %p201 = scmp.ne.s32.totalorder %s190, %s191
      %p202 = scmp.eq.s32.totalorder %s28, 0
      %p203 = por %p201, %p202
      %p204 = scmp.ne.s32.totalorder %s190, %s191
      %p205 = scmp.eq.s32.totalorder %s29, 1
      %p206 = por %p204, %p205
      %p208 = scmp.ne.s32.totalorder %s191, %s207
      %p209 = scmp.eq.s32.totalorder %s29, 0
      %p210 = por %p208, %p209
      %p211 = scmp.le.s32.totalorder 1, %s23
      %p212 = scmp.lt.s32.totalorder %s23, 3
      %p213 = pnand %p211, %p212
      %p214 = pneg %p213
      // Predicated region
      $region9: #{tpu_custom_call.1} parent=5 // pred_check
        _
      $region10: #{tpu_custom_call.1} parent=5 // pred_check_branch
        %216 = sbr.rel (%p213) target = $region12
      $region11: #{tpu_custom_call.1} parent=5 // pred_region
        %s217 = ssub.s32 %s23, 1
        // Predicated region
        $region13: #{tpu_custom_call.1} parent=11 // pred_check
          %p218 = pneg %p84
        $region14: #{tpu_custom_call.1} parent=11 // pred_check_branch
          %220 = sbr.rel (%p218) target = $region16
        $region15: #{tpu_custom_call.1} parent=11 // pred_region
          %s222 = ssub.s32 256, 256
          %223 = vsyncadd [#allocation6], %s222
          %s224 = sshll.u32 [#allocation5], 4
          %s225 = int_to_ptr.vmem [resolvable:$true] %s224
          %230 = dma.hbm_to_vmem [thread:$0]  %s1, 256, %s225, [#allocation6], 64, 64, 4
        $region16: #{tpu_custom_call.1} parent=11 // pred_fallthru
          _
        // Predicated region
        $region17: #{tpu_custom_call.1} parent=11 // pred_check
          %p231 = pneg %p105
        $region18: #{tpu_custom_call.1} parent=11 // pred_check_branch
          %233 = sbr.rel (%p231) target = $region20
        $region19: #{tpu_custom_call.1} parent=11 // pred_region
          _
        $region20: #{tpu_custom_call.1} parent=11 // pred_fallthru
          _
        // Predicated region
        $region21: #{tpu_custom_call.1} parent=11 // pred_check
          %p234 = pneg %p126
        $region22: #{tpu_custom_call.1} parent=11 // pred_check_branch
          %236 = sbr.rel (%p234) target = $region24
        $region23: #{tpu_custom_call.1} parent=11 // pred_region
          %s238 = ssub.s32 256, 256
          %239 = vsyncadd [#allocation6], %s238
          %s240 = sshll.u32 [#allocation7], 4
          %s241 = int_to_ptr.vmem [resolvable:$true] %s240
          %246 = dma.hbm_to_vmem [thread:$0]  %s3, 256, %s241, [#allocation6], 64, 64, 4
        $region24: #{tpu_custom_call.1} parent=11 // pred_fallthru
          _
        // Predicated region
        $region25: #{tpu_custom_call.1} parent=11 // pred_check
          %p247 = pneg %p147
        $region26: #{tpu_custom_call.1} parent=11 // pred_check_branch
          %249 = sbr.rel (%p247) target = $region28
        $region27: #{tpu_custom_call.1} parent=11 // pred_region
          _
        $region28: #{tpu_custom_call.1} parent=11 // pred_fallthru
          _
      $region12: #{tpu_custom_call.1} parent=5 // pred_fallthru
        _
      %p250 = scmp.lt.s32.totalorder %s23, 2
      // Predicated region
      $region29: #{tpu_custom_call.1} parent=5 // pred_check
        %p251 = pneg %p250
      $region30: #{tpu_custom_call.1} parent=5 // pred_check_branch
        %253 = sbr.rel (%p251) target = $region32
      $region31: #{tpu_custom_call.1} parent=5 // pred_region
        // Predicated region
        $region33: #{tpu_custom_call.1} parent=31 // pred_check
          %p254 = pneg %p57
        $region34: #{tpu_custom_call.1} parent=31 // pred_check_branch
          %256 = sbr.rel (%p254) target = $region36
        $region35: #{tpu_custom_call.1} parent=31 // pred_region
          %s257 = sand.u32 %s47, 1
          %s258 = scalar_lea.sflag [#allocation3], %s257
          %s259 = sand.u32 %s47, 1
          %s260 = smul.addr %s259, 4
          %s261 = scalar_lea.vmem [#allocation2], %s260
          %s263 = ssub.s32 64, 64
          %264 = vsyncadd %s258, %s263
          %s265 = sadd.s32 %s31, %s30
          %s266 = smul.addr %s265, 64
          %s267 = scalar_lea.hbm %s0, %s266
          %s269 = sshll.u32 %s261, 4
          %s270 = int_to_ptr.vmem [resolvable:$true] %s269
          %272 = dma.hbm_to_vmem [thread:$0]  %s267, 64, %s270, %s258
        $region36: #{tpu_custom_call.1} parent=31 // pred_fallthru
          _
      $region32: #{tpu_custom_call.1} parent=5 // pred_fallthru
        _
      %p273 = scmp.le.s32.totalorder 1, %s23
      %p274 = scmp.lt.s32.totalorder %s23, 3
      %p275 = pnand %p273, %p274
      %p276 = pneg %p275
      // Predicated region
      $region37: #{tpu_custom_call.1} parent=5 // pred_check
        _
      $region38: #{tpu_custom_call.1} parent=5 // pred_check_branch
        %278 = sbr.rel (%p275) target = $region40
      $region39: #{tpu_custom_call.1} parent=5 // pred_region
        %s279 = ssub.s32 %s23, 1
        %s280 = sand.u32 %s50, 1
        %s281 = scalar_lea.sflag [#allocation3], %s280
        %s282 = sand.u32 %s50, 1
        %s283 = smul.addr %s282, 4
        %s284 = scalar_lea.vmem [#allocation2], %s283
        // Predicated region
        $region41: #{tpu_custom_call.1} parent=39 // pred_check
          %p285 = pneg %p63
        $region42: #{tpu_custom_call.1} parent=39 // pred_check_branch
          %287 = sbr.rel (%p285) target = $region44
        $region43: #{tpu_custom_call.1} parent=39 // pred_region
          %288 = dma.done %s281, 64
        $region44: #{tpu_custom_call.1} parent=39 // pred_fallthru
          _
        // Predicated region
        $region45: #{tpu_custom_call.1} parent=39 // pred_check
          %p289 = pneg %p84
        $region46: #{tpu_custom_call.1} parent=39 // pred_check_branch
          %291 = sbr.rel (%p289) target = $region48
        $region47: #{tpu_custom_call.1} parent=39 // pred_region
          %292 = dma.done [#allocation6], 256
        $region48: #{tpu_custom_call.1} parent=39 // pred_fallthru
          _
        // Predicated region
        $region49: #{tpu_custom_call.1} parent=39 // pred_check
          %p293 = pneg %p126
        $region50: #{tpu_custom_call.1} parent=39 // pred_check_branch
          %295 = sbr.rel (%p293) target = $region52
        $region51: #{tpu_custom_call.1} parent=39 // pred_region
          %296 = dma.done [#allocation6], 256
        $region52: #{tpu_custom_call.1} parent=39 // pred_fallthru
          _
        %s297 = sand.u32 %s50, 1
        %s298 = scalar_lea.sflag [#allocation3], %s297
        %s299 = sand.u32 %s50, 1
        %s300 = smul.addr %s299, 4
        %s301 = scalar_lea.vmem [#allocation2], %s300
        %p302 = pneg %p63
        %p303 = pneg %p60
        %p304 = pneg %p84
        %p305 = pneg %p81
        %p306 = pneg %p105
        %p307 = pneg %p102
        %p308 = pneg %p126
        %p309 = pneg %p123
        %p310 = pneg %p147
        %p311 = pneg %p144
        %p312 = pneg %p175
        %p313 = pneg %p172
        %s314 = sand.u32 %s162, 1
        %s315 = scalar_lea.sflag [#allocation4], %s314
        %s316 = sand.u32 %s162, 1
        %s317 = smul.addr %s316, 16
        %s318 = scalar_lea.vmem [#allocation8], %s317
        %p319 = pneg %p203
        %p320 = pneg %p200
        %s321 = sand.u32 %s190, 1
        %s322 = scalar_lea.sflag [#allocation10], %s321
        %s323 = sand.u32 %s190, 1
        %s324 = smul.addr %s323, 16
        %s325 = scalar_lea.vmem [#allocation9], %s324
        %v327 = vld [vmem:[%s284] sm:$0xf]
        %v328 = vld [vmem:[#allocation5] sm:$0xf]
        %v329 = vld [vmem:[%s2] sm:$0x1]
        %v331 = vlaneseq
        %v332 = vshrl.u32 %v331, 7
        %v333 = vsub.s32 0, %v332
        %v334 = vrot.slane %v329, %v333
        %vm336 = vcmask 130048
        %v338 = vsel %vm336, %v327, 0
        %v341 = vsel %vm336, %v328, 0
        %343 = vmatprep.subr.bf16.mxu0 0
        %344 = vmatpush1.bf16.xpose.msra.mxu0 %v341
        %345 = vmatprep.subr.bf16.mxu0 0
        %346 = vmatpush1.bf16.xpose.msra.mxu0 0
        %347 = vmatprep.subr.bf16.mxu0 0
        %348 = vmatpush1.bf16.xpose.msra.mxu0 0
        %349 = vmatprep.subr.bf16.mxu0 0
        %350 = vmatpush1.bf16.xpose.msra.mxu0 0
        %351 = vmatprep.subr.bf16.mxu0 0
        %352 = vmatpush1.bf16.xpose.msra.mxu0 0
        %353 = vmatprep.subr.bf16.mxu0 0
        %354 = vmatpush1.bf16.xpose.msra.mxu0 0
        %355 = vmatprep.subr.bf16.mxu0 0
        %356 = vmatpush1.bf16.xpose.msra.mxu0 0
        %357 = vmatprep.subr.bf16.mxu0 0
        %358 = vmatpush1.bf16.xpose.msra.mxu0 0
        %359 = vmatprep.subr.bf16.mxu0 0
        %360 = vmatpush1.bf16.xpose.msra.mxu0 0
        %361 = vmatprep.subr.bf16.mxu0 0
        %362 = vmatpush1.bf16.xpose.msra.mxu0 0
        %363 = vmatprep.subr.bf16.mxu0 0
        %364 = vmatpush1.bf16.xpose.msra.mxu0 0
        %365 = vmatprep.subr.bf16.mxu0 0
        %366 = vmatpush1.bf16.xpose.msra.mxu0 0
        %367 = vmatprep.subr.bf16.mxu0 0
        %368 = vmatpush1.bf16.xpose.msra.mxu0 0
        %369 = vmatprep.subr.bf16.mxu0 0
        %370 = vmatpush1.bf16.xpose.msra.mxu0 0
        %371 = vmatprep.subr.bf16.mxu0 0
        %372 = vmatpush1.bf16.xpose.msra.mxu0 0
        %373 = vmatprep.subr.bf16.mxu0 0
        %374 = vmatpush1.bf16.xpose.msra.mxu0 0
        %375 = vmatprep.mubr.bf16.mxu0 0
        %376 = vmatmul.mubr.bf16.gmra.mrb[0].mxu0 %v338
        %v377 = vpop.f32.mrb[0].mxu0
        %v378 = vadd.f32 %v334, %v377
        %v379 = vpop.f32.mrb[0].mxu0
        %v380 = vpop.f32.mrb[0].mxu0
        %v381 = vpop.f32.mrb[0].mxu0
        %382 = vdwg.mxu0
        %v383 = vld [vmem:[#allocation7] sm:$0xf]
        %v384 = vld [vmem:[%s4] sm:$0x1]
        %v386 = vlaneseq
        %v387 = vshrl.u32 %v386, 7
        %v388 = vsub.s32 0, %v387
        %v389 = vrot.slane %v384, %v388
        %v392 = vsel %vm336, %v383, 0
        %394 = vmatprep.subr.bf16.mxu0 0
        %395 = vmatpush1.bf16.xpose.msra.mxu0 %v392
        %396 = vmatprep.subr.bf16.mxu0 0
        %397 = vmatpush1.bf16.xpose.msra.mxu0 0
        %398 = vmatprep.subr.bf16.mxu0 0
        %399 = vmatpush1.bf16.xpose.msra.mxu0 0
        %400 = vmatprep.subr.bf16.mxu0 0
        %401 = vmatpush1.bf16.xpose.msra.mxu0 0
        %402 = vmatprep.subr.bf16.mxu0 0
        %403 = vmatpush1.bf16.xpose.msra.mxu0 0
        %404 = vmatprep.subr.bf16.mxu0 0
        %405 = vmatpush1.bf16.xpose.msra.mxu0 0
        %406 = vmatprep.subr.bf16.mxu0 0
        %407 = vmatpush1.bf16.xpose.msra.mxu0 0
        %408 = vmatprep.subr.bf16.mxu0 0
        %409 = vmatpush1.bf16.xpose.msra.mxu0 0
        %410 = vmatprep.subr.bf16.mxu0 0
        %411 = vmatpush1.bf16.xpose.msra.mxu0 0
        %412 = vmatprep.subr.bf16.mxu0 0
        %413 = vmatpush1.bf16.xpose.msra.mxu0 0
        %414 = vmatprep.subr.bf16.mxu0 0
        %415 = vmatpush1.bf16.xpose.msra.mxu0 0
        %416 = vmatprep.subr.bf16.mxu0 0
        %417 = vmatpush1.bf16.xpose.msra.mxu0 0
        %418 = vmatprep.subr.bf16.mxu0 0
        %419 = vmatpush1.bf16.xpose.msra.mxu0 0
        %420 = vmatprep.subr.bf16.mxu0 0
        %421 = vmatpush1.bf16.xpose.msra.mxu0 0
        %422 = vmatprep.subr.bf16.mxu0 0
        %423 = vmatpush1.bf16.xpose.msra.mxu0 0
        %424 = vmatprep.subr.bf16.mxu0 0
        %425 = vmatpush1.bf16.xpose.msra.mxu0 0
        %426 = vmatprep.mubr.bf16.mxu0 0
        %427 = vmatmul.mubr.bf16.gmra.mrb[0].mxu0 %v338
        %v428 = vpop.f32.mrb[0].mxu0
        %v429 = vadd.f32 %v389, %v428
        %v430 = vpop.f32.mrb[0].mxu0
        %v431 = vpop.f32.mrb[0].mxu0
        %v432 = vpop.f32.mrb[0].mxu0
        %433 = vdwg.mxu0
        %v434 = vpack.c.bf16 %v378, %v378
        %vm435 = vcmask 60416
        %436 = vst.msk [vmem:[%s318] sm:$0xf] %vm435, %v434
        %v437 = vpack.c.bf16 %v429, %v429
        %438 = vst.msk [vmem:[%s325] sm:$0xf] %vm435, %v437
        %s439 = scalar_lea.vmem [#allocation5], 4
        %v440 = vld [vmem:[%s439] sm:$0xf]
        %s441 = scalar_lea.vmem %s2, 1
        %v442 = vld [vmem:[%s441] sm:$0x1]
        %v444 = vlaneseq
        %v445 = vshrl.u32 %v444, 7
        %v446 = vsub.s32 0, %v445
        %v447 = vrot.slane %v442, %v446
        %v450 = vsel %vm336, %v440, 0
        %452 = vmatprep.subr.bf16.mxu0 0
        %453 = vmatpush1.bf16.xpose.msra.mxu0 %v450
        %454 = vmatprep.subr.bf16.mxu0 0
        %455 = vmatpush1.bf16.xpose.msra.mxu0 0
        %456 = vmatprep.subr.bf16.mxu0 0
        %457 = vmatpush1.bf16.xpose.msra.mxu0 0
        %458 = vmatprep.subr.bf16.mxu0 0
        %459 = vmatpush1.bf16.xpose.msra.mxu0 0
        %460 = vmatprep.subr.bf16.mxu0 0
        %461 = vmatpush1.bf16.xpose.msra.mxu0 0
        %462 = vmatprep.subr.bf16.mxu0 0
        %463 = vmatpush1.bf16.xpose.msra.mxu0 0
        %464 = vmatprep.subr.bf16.mxu0 0
        %465 = vmatpush1.bf16.xpose.msra.mxu0 0
        %466 = vmatprep.subr.bf16.mxu0 0
        %467 = vmatpush1.bf16.xpose.msra.mxu0 0
        %468 = vmatprep.subr.bf16.mxu0 0
        %469 = vmatpush1.bf16.xpose.msra.mxu0 0
        %470 = vmatprep.subr.bf16.mxu0 0
        %471 = vmatpush1.bf16.xpose.msra.mxu0 0
        %472 = vmatprep.subr.bf16.mxu0 0
        %473 = vmatpush1.bf16.xpose.msra.mxu0 0
        %474 = vmatprep.subr.bf16.mxu0 0
        %475 = vmatpush1.bf16.xpose.msra.mxu0 0
        %476 = vmatprep.subr.bf16.mxu0 0
        %477 = vmatpush1.bf16.xpose.msra.mxu0 0
        %478 = vmatprep.subr.bf16.mxu0 0
        %479 = vmatpush1.bf16.xpose.msra.mxu0 0
        %480 = vmatprep.subr.bf16.mxu0 0
        %481 = vmatpush1.bf16.xpose.msra.mxu0 0
        %482 = vmatprep.subr.bf16.mxu0 0
        %483 = vmatpush1.bf16.xpose.msra.mxu0 0
        %484 = vmatprep.mubr.bf16.mxu0 0
        %485 = vmatmul.mubr.bf16.gmra.mrb[0].mxu0 %v338
        %v486 = vpop.f32.mrb[0].mxu0
        %v487 = vadd.f32 %v447, %v486
        %v488 = vpop.f32.mrb[0].mxu0
        %v489 = vpop.f32.mrb[0].mxu0
        %v490 = vpop.f32.mrb[0].mxu0
        %491 = vdwg.mxu0
        %s492 = scalar_lea.vmem [#allocation7], 4
        %v493 = vld [vmem:[%s492] sm:$0xf]
        %s494 = scalar_lea.vmem %s4, 1
        %v495 = vld [vmem:[%s494] sm:$0x1]
        %v497 = vlaneseq
        %v498 = vshrl.u32 %v497, 7
        %v499 = vsub.s32 0, %v498
        %v500 = vrot.slane %v495, %v499
        %v503 = vsel %vm336, %v493, 0
        %505 = vmatprep.subr.bf16.mxu0 0
        %506 = vmatpush1.bf16.xpose.msra.mxu0 %v503
        %507 = vmatprep.subr.bf16.mxu0 0
        %508 = vmatpush1.bf16.xpose.msra.mxu0 0
        %509 = vmatprep.subr.bf16.mxu0 0
        %510 = vmatpush1.bf16.xpose.msra.mxu0 0
        %511 = vmatprep.subr.bf16.mxu0 0
        %512 = vmatpush1.bf16.xpose.msra.mxu0 0
        %513 = vmatprep.subr.bf16.mxu0 0
        %514 = vmatpush1.bf16.xpose.msra.mxu0 0
        %515 = vmatprep.subr.bf16.mxu0 0
        %516 = vmatpush1.bf16.xpose.msra.mxu0 0
        %517 = vmatprep.subr.bf16.mxu0 0
        %518 = vmatpush1.bf16.xpose.msra.mxu0 0
        %519 = vmatprep.subr.bf16.mxu0 0
        %520 = vmatpush1.bf16.xpose.msra.mxu0 0
        %521 = vmatprep.subr.bf16.mxu0 0
        %522 = vmatpush1.bf16.xpose.msra.mxu0 0
        %523 = vmatprep.subr.bf16.mxu0 0
        %524 = vmatpush1.bf16.xpose.msra.mxu0 0
        %525 = vmatprep.subr.bf16.mxu0 0
        %526 = vmatpush1.bf16.xpose.msra.mxu0 0
        %527 = vmatprep.subr.bf16.mxu0 0
        %528 = vmatpush1.bf16.xpose.msra.mxu0 0
        %529 = vmatprep.subr.bf16.mxu0 0
        %530 = vmatpush1.bf16.xpose.msra.mxu0 0
        %531 = vmatprep.subr.bf16.mxu0 0
        %532 = vmatpush1.bf16.xpose.msra.mxu0 0
        %533 = vmatprep.subr.bf16.mxu0 0
        %534 = vmatpush1.bf16.xpose.msra.mxu0 0
        %535 = vmatprep.subr.bf16.mxu0 0
        %536 = vmatpush1.bf16.xpose.msra.mxu0 0
        %537 = vmatprep.mubr.bf16.mxu0 0
        %538 = vmatmul.mubr.bf16.gmra.mrb[0].mxu0 %v338
        %v539 = vpop.f32.mrb[0].mxu0
        %v540 = vadd.f32 %v500, %v539
        %v541 = vpop.f32.mrb[0].mxu0
        %v542 = vpop.f32.mrb[0].mxu0
        %v543 = vpop.f32.mrb[0].mxu0
        %544 = vdwg.mxu0
        %v545 = vpack.c.bf16 %v487, %v487
        %s546 = scalar_lea.vmem %s318, 4 [#allocation8]
        %547 = vst.msk [vmem:[%s546] sm:$0xf] %vm435, %v545
        %v548 = vpack.c.bf16 %v540, %v540
        %s549 = scalar_lea.vmem %s325, 4 [#allocation9]
        %550 = vst.msk [vmem:[%s549] sm:$0xf] %vm435, %v548
        %s551 = scalar_lea.vmem [#allocation5], 8
        %v552 = vld [vmem:[%s551] sm:$0xf]
        %s553 = scalar_lea.vmem %s2, 2
        %v554 = vld [vmem:[%s553] sm:$0x1]
        %v556 = vlaneseq
        %v557 = vshrl.u32 %v556, 7
        %v558 = vsub.s32 0, %v557
        %v559 = vrot.slane %v554, %v558
        %v562 = vsel %vm336, %v552, 0
        %564 = vmatprep.subr.bf16.mxu0 0
        %565 = vmatpush1.bf16.xpose.msra.mxu0 %v562
        %566 = vmatprep.subr.bf16.mxu0 0
        %567 = vmatpush1.bf16.xpose.msra.mxu0 0
        %568 = vmatprep.subr.bf16.mxu0 0
        %569 = vmatpush1.bf16.xpose.msra.mxu0 0
        %570 = vmatprep.subr.bf16.mxu0 0
        %571 = vmatpush1.bf16.xpose.msra.mxu0 0
        %572 = vmatprep.subr.bf16.mxu0 0
        %573 = vmatpush1.bf16.xpose.msra.mxu0 0
        %574 = vmatprep.subr.bf16.mxu0 0
        %575 = vmatpush1.bf16.xpose.msra.mxu0 0
        %576 = vmatprep.subr.bf16.mxu0 0
        %577 = vmatpush1.bf16.xpose.msra.mxu0 0
        %578 = vmatprep.subr.bf16.mxu0 0
        %579 = vmatpush1.bf16.xpose.msra.mxu0 0
        %580 = vmatprep.subr.bf16.mxu0 0
        %581 = vmatpush1.bf16.xpose.msra.mxu0 0
        %582 = vmatprep.subr.bf16.mxu0 0
        %583 = vmatpush1.bf16.xpose.msra.mxu0 0
        %584 = vmatprep.subr.bf16.mxu0 0
        %585 = vmatpush1.bf16.xpose.msra.mxu0 0
        %586 = vmatprep.subr.bf16.mxu0 0
        %587 = vmatpush1.bf16.xpose.msra.mxu0 0
        %588 = vmatprep.subr.bf16.mxu0 0
        %589 = vmatpush1.bf16.xpose.msra.mxu0 0
        %590 = vmatprep.subr.bf16.mxu0 0
        %591 = vmatpush1.bf16.xpose.msra.mxu0 0
        %592 = vmatprep.subr.bf16.mxu0 0
        %593 = vmatpush1.bf16.xpose.msra.mxu0 0
        %594 = vmatprep.subr.bf16.mxu0 0
        %595 = vmatpush1.bf16.xpose.msra.mxu0 0
        %596 = vmatprep.mubr.bf16.mxu0 0
        %597 = vmatmul.mubr.bf16.gmra.mrb[0].mxu0 %v338
        %v598 = vpop.f32.mrb[0].mxu0
        %v599 = vadd.f32 %v559, %v598
        %v600 = vpop.f32.mrb[0].mxu0
        %v601 = vpop.f32.mrb[0].mxu0
        %v602 = vpop.f32.mrb[0].mxu0
        %603 = vdwg.mxu0
        %s604 = scalar_lea.vmem [#allocation7], 8
        %v605 = vld [vmem:[%s604] sm:$0xf]
        %s606 = scalar_lea.vmem %s4, 2
        %v607 = vld [vmem:[%s606] sm:$0x1]
        %v609 = vlaneseq
        %v610 = vshrl.u32 %v609, 7
        %v611 = vsub.s32 0, %v610
        %v612 = vrot.slane %v607, %v611
        %v615 = vsel %vm336, %v605, 0
        %617 = vmatprep.subr.bf16.mxu0 0
        %618 = vmatpush1.bf16.xpose.msra.mxu0 %v615
        %619 = vmatprep.subr.bf16.mxu0 0
        %620 = vmatpush1.bf16.xpose.msra.mxu0 0
        %621 = vmatprep.subr.bf16.mxu0 0
        %622 = vmatpush1.bf16.xpose.msra.mxu0 0
        %623 = vmatprep.subr.bf16.mxu0 0
        %624 = vmatpush1.bf16.xpose.msra.mxu0 0
        %625 = vmatprep.subr.bf16.mxu0 0
        %626 = vmatpush1.bf16.xpose.msra.mxu0 0
        %627 = vmatprep.subr.bf16.mxu0 0
        %628 = vmatpush1.bf16.xpose.msra.mxu0 0
        %629 = vmatprep.subr.bf16.mxu0 0
        %630 = vmatpush1.bf16.xpose.msra.mxu0 0
        %631 = vmatprep.subr.bf16.mxu0 0
        %632 = vmatpush1.bf16.xpose.msra.mxu0 0
        %633 = vmatprep.subr.bf16.mxu0 0
        %634 = vmatpush1.bf16.xpose.msra.mxu0 0
        %635 = vmatprep.subr.bf16.mxu0 0
        %636 = vmatpush1.bf16.xpose.msra.mxu0 0
        %637 = vmatprep.subr.bf16.mxu0 0
        %638 = vmatpush1.bf16.xpose.msra.mxu0 0
        %639 = vmatprep.subr.bf16.mxu0 0
        %640 = vmatpush1.bf16.xpose.msra.mxu0 0
        %641 = vmatprep.subr.bf16.mxu0 0
        %642 = vmatpush1.bf16.xpose.msra.mxu0 0
        %643 = vmatprep.subr.bf16.mxu0 0
        %644 = vmatpush1.bf16.xpose.msra.mxu0 0
        %645 = vmatprep.subr.bf16.mxu0 0
        %646 = vmatpush1.bf16.xpose.msra.mxu0 0
        %647 = vmatprep.subr.bf16.mxu0 0
        %648 = vmatpush1.bf16.xpose.msra.mxu0 0
        %649 = vmatprep.mubr.bf16.mxu0 0
        %650 = vmatmul.mubr.bf16.gmra.mrb[0].mxu0 %v338
        %v651 = vpop.f32.mrb[0].mxu0
        %v652 = vadd.f32 %v612, %v651
        %v653 = vpop.f32.mrb[0].mxu0
        %v654 = vpop.f32.mrb[0].mxu0
        %v655 = vpop.f32.mrb[0].mxu0
        %656 = vdwg.mxu0
        %v657 = vpack.c.bf16 %v599, %v599
        %s658 = scalar_lea.vmem %s318, 8 [#allocation8]
        %659 = vst.msk [vmem:[%s658] sm:$0xf] %vm435, %v657
        %v660 = vpack.c.bf16 %v652, %v652
        %s661 = scalar_lea.vmem %s325, 8 [#allocation9]
        %662 = vst.msk [vmem:[%s661] sm:$0xf] %vm435, %v660
        %s663 = scalar_lea.vmem [#allocation5], 12
        %v664 = vld [vmem:[%s663] sm:$0xf]
        %s665 = scalar_lea.vmem %s2, 3
        %v666 = vld [vmem:[%s665] sm:$0x1]
        %v668 = vlaneseq
        %v669 = vshrl.u32 %v668, 7
        %v670 = vsub.s32 0, %v669
        %v671 = vrot.slane %v666, %v670
        %v674 = vsel %vm336, %v664, 0
        %676 = vmatprep.subr.bf16.mxu0 0
        %677 = vmatpush1.bf16.xpose.msra.mxu0 %v674
        %678 = vmatprep.subr.bf16.mxu0 0
        %679 = vmatpush1.bf16.xpose.msra.mxu0 0
        %680 = vmatprep.subr.bf16.mxu0 0
        %681 = vmatpush1.bf16.xpose.msra.mxu0 0
        %682 = vmatprep.subr.bf16.mxu0 0
        %683 = vmatpush1.bf16.xpose.msra.mxu0 0
        %684 = vmatprep.subr.bf16.mxu0 0
        %685 = vmatpush1.bf16.xpose.msra.mxu0 0
        %686 = vmatprep.subr.bf16.mxu0 0
        %687 = vmatpush1.bf16.xpose.msra.mxu0 0
        %688 = vmatprep.subr.bf16.mxu0 0
        %689 = vmatpush1.bf16.xpose.msra.mxu0 0
        %690 = vmatprep.subr.bf16.mxu0 0
        %691 = vmatpush1.bf16.xpose.msra.mxu0 0
        %692 = vmatprep.subr.bf16.mxu0 0
        %693 = vmatpush1.bf16.xpose.msra.mxu0 0
        %694 = vmatprep.subr.bf16.mxu0 0
        %695 = vmatpush1.bf16.xpose.msra.mxu0 0
        %696 = vmatprep.subr.bf16.mxu0 0
        %697 = vmatpush1.bf16.xpose.msra.mxu0 0
        %698 = vmatprep.subr.bf16.mxu0 0
        %699 = vmatpush1.bf16.xpose.msra.mxu0 0
        %700 = vmatprep.subr.bf16.mxu0 0
        %701 = vmatpush1.bf16.xpose.msra.mxu0 0
        %702 = vmatprep.subr.bf16.mxu0 0
        %703 = vmatpush1.bf16.xpose.msra.mxu0 0
        %704 = vmatprep.subr.bf16.mxu0 0
        %705 = vmatpush1.bf16.xpose.msra.mxu0 0
        %706 = vmatprep.subr.bf16.mxu0 0
        %707 = vmatpush1.bf16.xpose.msra.mxu0 0
        %708 = vmatprep.mubr.bf16.mxu0 0
        %709 = vmatmul.mubr.bf16.gmra.mrb[0].mxu0 %v338
        %v710 = vpop.f32.mrb[0].mxu0
        %v711 = vadd.f32 %v671, %v710
        %v712 = vpop.f32.mrb[0].mxu0
        %v713 = vpop.f32.mrb[0].mxu0
        %v714 = vpop.f32.mrb[0].mxu0
        %715 = vdwg.mxu0
        %s716 = scalar_lea.vmem [#allocation7], 12
        %v717 = vld [vmem:[%s716] sm:$0xf]
        %s718 = scalar_lea.vmem %s4, 3
        %v719 = vld [vmem:[%s718] sm:$0x1]
        %v721 = vlaneseq
        %v722 = vshrl.u32 %v721, 7
        %v723 = vsub.s32 0, %v722
        %v724 = vrot.slane %v719, %v723
        %v727 = vsel %vm336, %v717, 0
        %729 = vmatprep.subr.bf16.mxu0 0
        %730 = vmatpush1.bf16.xpose.msra.mxu0 %v727
        %731 = vmatprep.subr.bf16.mxu0 0
        %732 = vmatpush1.bf16.xpose.msra.mxu0 0
        %733 = vmatprep.subr.bf16.mxu0 0
        %734 = vmatpush1.bf16.xpose.msra.mxu0 0
        %735 = vmatprep.subr.bf16.mxu0 0
        %736 = vmatpush1.bf16.xpose.msra.mxu0 0
        %737 = vmatprep.subr.bf16.mxu0 0
        %738 = vmatpush1.bf16.xpose.msra.mxu0 0
        %739 = vmatprep.subr.bf16.mxu0 0
        %740 = vmatpush1.bf16.xpose.msra.mxu0 0
        %741 = vmatprep.subr.bf16.mxu0 0
        %742 = vmatpush1.bf16.xpose.msra.mxu0 0
        %743 = vmatprep.subr.bf16.mxu0 0
        %744 = vmatpush1.bf16.xpose.msra.mxu0 0
        %745 = vmatprep.subr.bf16.mxu0 0
        %746 = vmatpush1.bf16.xpose.msra.mxu0 0
        %747 = vmatprep.subr.bf16.mxu0 0
        %748 = vmatpush1.bf16.xpose.msra.mxu0 0
        %749 = vmatprep.subr.bf16.mxu0 0
        %750 = vmatpush1.bf16.xpose.msra.mxu0 0
        %751 = vmatprep.subr.bf16.mxu0 0
        %752 = vmatpush1.bf16.xpose.msra.mxu0 0
        %753 = vmatprep.subr.bf16.mxu0 0
        %754 = vmatpush1.bf16.xpose.msra.mxu0 0
        %755 = vmatprep.subr.bf16.mxu0 0
        %756 = vmatpush1.bf16.xpose.msra.mxu0 0
        %757 = vmatprep.subr.bf16.mxu0 0
        %758 = vmatpush1.bf16.xpose.msra.mxu0 0
        %759 = vmatprep.subr.bf16.mxu0 0
        %760 = vmatpush1.bf16.xpose.msra.mxu0 0
        %761 = vmatprep.mubr.bf16.mxu0 0
        %762 = vmatmul.mubr.bf16.gmra.mrb[0].mxu0 %v338
        %v763 = vpop.f32.mrb[0].mxu0
        %v764 = vadd.f32 %v724, %v763
        %v765 = vpop.f32.mrb[0].mxu0
        %v766 = vpop.f32.mrb[0].mxu0
        %v767 = vpop.f32.mrb[0].mxu0
        %768 = vdwg.mxu0
        %v769 = vpack.c.bf16 %v711, %v711
        %s770 = scalar_lea.vmem %s318, 12 [#allocation8]
        %771 = vst.msk [vmem:[%s770] sm:$0xf] %vm435, %v769
        %v772 = vpack.c.bf16 %v764, %v764
        %s773 = scalar_lea.vmem %s325, 12 [#allocation9]
        %774 = vst.msk [vmem:[%s773] sm:$0xf] %vm435, %v772
        %s775 = sand.u32 %s162, 1
        %s776 = scalar_lea.sflag [#allocation4], %s775
        %s777 = sand.u32 %s162, 1
        %s778 = smul.addr %s777, 16
        %s779 = scalar_lea.vmem [#allocation8], %s778
        %s780 = sand.u32 %s190, 1
        %s781 = scalar_lea.sflag [#allocation10], %s780
        %s782 = sand.u32 %s190, 1
        %s783 = smul.addr %s782, 16
        %s784 = scalar_lea.vmem [#allocation9], %s783
        // Predicated region
        $region53: #{tpu_custom_call.1} parent=39 // pred_check
          %p785 = pneg %p172
        $region54: #{tpu_custom_call.1} parent=39 // pred_check_branch
          %787 = sbr.rel (%p785) target = $region56
        $region55: #{tpu_custom_call.1} parent=39 // pred_region
          %s789 = ssub.s32 256, 256
          %790 = vsyncadd %s776, %s789
          %s791 = smul.addr %s32, 4
          %s792 = sadd.s32 %s33, %s791
          %s793 = smul.addr %s792, 64
          %s794 = scalar_lea.hbm %s5, %s793
          %s795 = sshll.u32 %s779, 4
          %s796 = int_to_ptr.vmem [resolvable:$true] %s795
          %801 = dma.vmem_to_hbm [thread:$0]  %s796, 256, %s794, %s776, 64, 64, 4
        $region56: #{tpu_custom_call.1} parent=39 // pred_fallthru
          _
        // Predicated region
        $region57: #{tpu_custom_call.1} parent=39 // pred_check
          %p802 = pneg %p200
        $region58: #{tpu_custom_call.1} parent=39 // pred_check_branch
          %804 = sbr.rel (%p802) target = $region60
        $region59: #{tpu_custom_call.1} parent=39 // pred_region
          %s806 = ssub.s32 256, 256
          %807 = vsyncadd %s781, %s806
          %s808 = smul.addr %s32, 4
          %s809 = sadd.s32 %s33, %s808
          %s810 = smul.addr %s809, 64
          %s811 = scalar_lea.hbm %s6, %s810
          %s812 = sshll.u32 %s784, 4
          %s813 = int_to_ptr.vmem [resolvable:$true] %s812
          %818 = dma.vmem_to_hbm [thread:$0]  %s813, 256, %s811, %s781, 64, 64, 4
        $region60: #{tpu_custom_call.1} parent=39 // pred_fallthru
          _
      $region40: #{tpu_custom_call.1} parent=5 // pred_fallthru
        _
      %p819 = scmp.le.s32.totalorder 2, %s23
      // Predicated region
      $region61: #{tpu_custom_call.1} parent=5 // pred_check
        %p820 = pneg %p819
      $region62: #{tpu_custom_call.1} parent=5 // pred_check_branch
        %822 = sbr.rel (%p820) target = $region64
      $region63: #{tpu_custom_call.1} parent=5 // pred_region
        %s823 = ssub.s32 %s23, 2
        // Predicated region
        $region65: #{tpu_custom_call.1} parent=63 // pred_check
          %p824 = pneg %p178
        $region66: #{tpu_custom_call.1} parent=63 // pred_check_branch
          %826 = sbr.rel (%p824) target = $region68
        $region67: #{tpu_custom_call.1} parent=63 // pred_region
          %s827 = sand.u32 %s163, 1
          %s828 = scalar_lea.sflag [#allocation4], %s827
          %s829 = sand.u32 %s163, 1
          %s830 = smul.addr %s829, 16
          %s831 = scalar_lea.vmem [#allocation8], %s830
          %832 = dma.done %s828, 256
        $region68: #{tpu_custom_call.1} parent=63 // pred_fallthru
          _
        // Predicated region
        $region69: #{tpu_custom_call.1} parent=63 // pred_check
          %p833 = pneg %p206
        $region70: #{tpu_custom_call.1} parent=63 // pred_check_branch
          %835 = sbr.rel (%p833) target = $region72
        $region71: #{tpu_custom_call.1} parent=63 // pred_region
          %s836 = sand.u32 %s191, 1
          %s837 = scalar_lea.sflag [#allocation10], %s836
          %s838 = sand.u32 %s191, 1
          %s839 = smul.addr %s838, 16
          %s840 = scalar_lea.vmem [#allocation9], %s839
          %841 = dma.done %s837, 256
        $region72: #{tpu_custom_call.1} parent=63 // pred_fallthru
          _
      $region64: #{tpu_custom_call.1} parent=5 // pred_fallthru
        _
    $region6: #{tpu_custom_call.1} parent=1 // loop_footer
      %s27 = sadd.s32 1, %s23
    $region7: #{tpu_custom_call.1} parent=1 // loop_footer_branch
      %22 = sbr.rel target = $region3
    $region8: #{tpu_custom_call.1} parent=1 // loop_exit
      _
    %842 = vsyncpa [#allocation3], 1
    %s843 = scalar_lea.sflag [#allocation3], 1
    %844 = vsyncpa %s843, 1
    %845 = vsyncpa [#allocation6], 1
    %846 = vsyncpa [#allocation4], 1
    %s847 = scalar_lea.sflag [#allocation4], 1
    %848 = vsyncpa %s847, 1
    %849 = vsyncpa [#allocation10], 1
    %s850 = scalar_lea.sflag [#allocation10], 1
    %851 = vsyncpa %s850, 1

</llo_original>
